<compile_context>
chip_gen: v5e
topology: v5e:2x2
jax: 0.10.0
libtpu: 0.0.40
codegen_flags: <defaults>
</compile_context>

<pallas_src>
import math

import jax
import jax.numpy as jnp
import numpy as np
from jax.experimental import pallas as pl
from jax.experimental.pallas import tpu as pltpu

# ----------------------------- configuration -------------------------------
D_MODEL = 32
D_INNER = 64          # expand * d_model
D_XB = 32
D_STATE = 16
D_CONV = 4
DT_RANK = math.ceil(D_MODEL / 16)          # 'auto' -> 2
NUM_XB_HEAD = D_XB // D_STATE              # 2
NUM_C_HEAD = D_INNER // D_STATE            # 4
REPEAT_GROUP = NUM_C_HEAD // NUM_XB_HEAD   # 2
D_PROJ = 2 * D_XB + 2 * D_INNER + DT_RANK  # 194

PACK = 2                                   # batch elements packed along lanes
P_CH = PACK * D_INNER                      # 128 packed channels = full vreg width

BATCH = 2
SEQLEN = 8

DT_MIN, DT_MAX, DT_INIT_FLOOR = 0.001, 0.1, 1e-4


def _softplus(x):
    return jnp.where(x > 20.0, x, jnp.log(1.0 + jnp.exp(jnp.minimum(x, 20.0))))


def _silu(x):
    return x * (1.0 / (1.0 + jnp.exp(-x)))


# ------------------------------- the kernel --------------------------------
def mamba_kernel(h_ref, wtm_ref, wcm_ref, dtb2_ref, convw_ref, convb_ref,
                 at_ref, d_ref, wout_ref, out_ref):
    f32 = jnp.float32
    N = D_STATE
    DI = D_INNER
    L = h_ref.shape[1]

    # ---- fused time-major projection for the whole batch pair ---------------
    # columns: [ z | x (repeat_kv folded into weights) | dt (dt_proj folded) ]
    h_flat = h_ref[...].reshape(PACK * L, D_MODEL)                        # (2L, d_model)
    p_tm = jnp.dot(h_flat, wtm_ref[...], preferred_element_type=f32)     # (2L, 3*d_inner)

    def lane_pack(lo, hi):
        # per-batch (L, hi-lo) row blocks -> (L, PACK*(hi-lo)) packed on lanes
        return jnp.concatenate(
            [p_tm[b * L:(b + 1) * L, lo:hi] for b in range(PACK)], axis=1)

    z_pk = lane_pack(0, DI)                   # (L, 128)
    x_pk = lane_pack(DI, 2 * DI)              # (L, 128)  already repeat_kv'd
    dt_pk = lane_pack(2 * DI, 3 * DI)         # (L, 128)

    # ---- channel-major projection for B and C (state index on sublanes) -----
    # (d_xb + d_inner, d_model) . (2L, d_model)^T -> (d_xb + d_inner, 2L)
    bc_cm = jax.lax.dot_general(wcm_ref[...], h_flat, (((1,), (1,)), ((), ())),
                                preferred_element_type=f32)
    # batch b lives in columns [b*L, (b+1)*L)

    # ---- depthwise causal conv1d + SiLU (O(L), zero-padded shifted slices) ---
    acc = convw_ref[D_CONV - 1:D_CONV, :] * x_pk          # tap with shift 0
    for k in range(D_CONV - 1):
        s = D_CONV - 1 - k                                  # shift 3, 2, 1
        shifted = jnp.concatenate(
            [jnp.zeros((s, P_CH), f32), x_pk[:L - s, :]], axis=0)
        acc = acc + convw_ref[k:k + 1, :] * shifted
    x_conv = _silu(acc + convb_ref[...])                    # (L, 128)

    # ---- selective scan ------------------------------------------------------
    # NOTE: dt_proj bias enters twice (Linear bias + delta_bias), exactly as
    # the PyTorch module does; the wrapper passes 2*dt_bias.
    delta = _softplus(dt_pk + dtb2_ref[...])                # (L, 128)
    dx = delta * x_conv                                     # (L, 128)
    A_T = at_ref[...]                                       # (N, 128) = -exp(A_log).T packed

    lane = jax.lax.broadcasted_iota(jnp.int32, (N, P_CH), 1)

    def sel(cands, width):
        # nested select over packed-lane index; cands[j] is an (N, 1) column
        out = cands[-1]
        for j in range(len(cands) - 2, -1, -1):
            out = jnp.where(lane < (j + 1) * width, cands[j], out)
        return out                                          # (N, P_CH)

    state = jnp.zeros((N, P_CH), f32)                       # n on sublanes, packed channel on lanes
    y_rows = []
    # TODO(synk): for long L hoist dA / B_exp / C_exp into chunked (Lc, N, P)
    # precomputes and convert this unrolled loop to lax.fori_loop with a
    # states VMEM scratch; only the state FMA must stay serial.
    for t in range(L):
        dA = jnp.exp(delta[t:t + 1, :] * A_T)               # (N, 128)
        b_cands = [bc_cm[g * N:(g + 1) * N, b * L + t:b * L + t + 1]
                   for b in range(PACK) for g in range(NUM_XB_HEAD)]
        c_cands = [bc_cm[D_XB + hh * N:D_XB + (hh + 1) * N, b * L + t:b * L + t + 1]
                   for b in range(PACK) for hh in range(NUM_C_HEAD)]
        B_exp = sel(b_cands, REPEAT_GROUP * N)               # (N, 128)
        C_exp = sel(c_cands, N)                              # (N, 128)
        state = dA * state + dx[t:t + 1, :] * B_exp
        y_rows.append(jnp.sum(state * C_exp, axis=0, keepdims=True))
    y = jnp.concatenate(y_rows, axis=0)                      # (L, 128)

    # ---- skip + gate + block-diagonal out-projection -------------------------
    y = (y + d_ref[...] * x_conv) * _silu(z_pk)
    out_pk = jnp.dot(y, wout_ref[...], preferred_element_type=f32)   # (L, PACK*d_model)
    for b in range(PACK):
        out_ref[b] = out_pk[:, b * D_MODEL:(b + 1) * D_MODEL]


# ------------------------------- wrapper ------------------------------------
@jax.jit
def mamba_forward(hidden_states, params):
    B, L, Dm = hidden_states.shape
    assert B % PACK == 0, "batch must be a multiple of the lane-pack factor"

    W_in = params["W_in"]
    W_z = W_in[:D_INNER]
    W_x = W_in[D_INNER:D_INNER + D_XB]
    W_B = W_in[D_INNER + D_XB:D_INNER + 2 * D_XB]
    W_C = W_in[D_INNER + 2 * D_XB:2 * D_INNER + 2 * D_XB]
    W_dtr = W_in[2 * D_INNER + 2 * D_XB:]

    # Fold repeat_kv into the x projection rows: inner channel (hh, p) reads
    # xb-group hh // REPEAT_GROUP.
    row_idx = np.concatenate([
        (hh // REPEAT_GROUP) * D_STATE + np.arange(D_STATE)
        for hh in range(NUM_C_HEAD)])
    W_x_rep = W_x[row_idx]                                    # (d_inner, d_model)

    # Fold dt_proj into the fused time-major projection.
    W_dt_fold = params["W_dt"] @ W_dtr                        # (d_inner, d_model)

    W_tm = jnp.concatenate([W_z, W_x_rep, W_dt_fold], axis=0)  # (3*d_inner, d_model)
    W_cm = jnp.concatenate([W_B, W_C], axis=0)                 # (d_xb+d_inner, d_model)

    def pack_lanes(a):
        return jnp.concatenate([a] * PACK, axis=-1)

    dtb2_pk = pack_lanes(2.0 * params["dt_bias"][None, :])    # (1, 128)
    conv_w_pk = pack_lanes(params["conv_w"].T)                # (d_conv, 128)
    conv_b_pk = pack_lanes(params["conv_b"][None, :])         # (1, 128)
    a_neg_pk = pack_lanes((-jnp.exp(params["A_log"])).T)      # (d_state, 128)
    d_pk = pack_lanes(params["D"][None, :])                   # (1, 128)

    # Block-diagonal out projection: one 128-wide contraction for both packed
    # batch elements.
    W_outT = params["W_out"].T                                # (d_inner, d_model)
    zeros = jnp.zeros_like(W_outT)
    W_out_bd = jnp.concatenate(
        [jnp.concatenate([W_outT, zeros], axis=1),
         jnp.concatenate([zeros, W_outT], axis=1)], axis=0)   # (128, 2*d_model)

    args = (
        hidden_states,         # (B, L, d_model)
        W_tm.T,                # (d_model, 3*d_inner)
        W_cm,                  # (d_xb+d_inner, d_model)
        dtb2_pk,               # (1, 128)
        conv_w_pk,             # (d_conv, 128)
        conv_b_pk,             # (1, 128)
        a_neg_pk,              # (d_state, 128)
        d_pk,                  # (1, 128)
        W_out_bd,              # (128, 2*d_model)
    )

    def full_spec(a):
        nd = a.ndim
        return pl.BlockSpec(a.shape, lambda i, _n=nd: (0,) * _n)

    in_specs = [pl.BlockSpec((PACK, L, Dm), lambda i: (i, 0, 0))] + \
               [full_spec(a) for a in args[1:]]
    out_spec = pl.BlockSpec((PACK, L, Dm), lambda i: (i, 0, 0))

    out = pl.pallas_call(
        mamba_kernel,
        out_shape=jax.ShapeDtypeStruct((B, L, Dm), jnp.float32),
        grid_spec=pltpu.PrefetchScalarGridSpec(
            num_scalar_prefetch=0,
            grid=(B // PACK,),          # one grid step per batch PAIR
            in_specs=in_specs,
            out_specs=out_spec,
        ),
        compiler_params=pltpu.CompilerParams(
            dimension_semantics=("parallel",)),
    )(*args)
    return out                                  # (B, L, d_model)


# --------------------------- pure-JAX reference ------------------------------
def mamba_reference(h, p):
    HI = jax.lax.Precision.HIGHEST
    Bsz, L, _ = h.shape
    N, H, nxb, rep = D_STATE, NUM_C_HEAD, NUM_XB_HEAD, REPEAT_GROUP

    zxbcdt = jnp.einsum("bld,pd->blp", h, p["W_in"], precision=HI)
    z = zxbcdt[..., :D_INNER]
    x = zxbcdt[..., D_INNER:D_INNER + D_XB]
    Bm = zxbcdt[..., D_INNER + D_XB:D_INNER + 2 * D_XB]
    Cm = zxbcdt[..., D_INNER + 2 * D_XB:2 * D_INNER + 2 * D_XB]
    dtr = zxbcdt[..., 2 * D_INNER + 2 * D_XB:]

    dt = jnp.einsum("blr,dr->bld", dtr, p["W_dt"], precision=HI) + p["dt_bias"]

    x_t = jnp.transpose(x, (0, 2, 1))          # (b, d_xb, L)
    z_t = jnp.transpose(z, (0, 2, 1))          # (b, d_inner, L)
    dt_t = jnp.transpose(dt, (0, 2, 1))        # (b, d_inner, L)

    Bh = Bm.reshape(Bsz, L, nxb, N).transpose(0, 2, 1, 3)   # b g L n
    Bh = jnp.repeat(Bh, rep, axis=1)                        # b H L n (repeat_kv)
    Bh = Bh.transpose(0, 1, 3, 2)                           # b H n L
    Ch = Cm.reshape(Bsz, L, H, N).transpose(0, 2, 3, 1)     # b H n L

    # repeat_kv(x) before conv
    xg = x_t.reshape(Bsz, nxb, N, L).transpose(0, 1, 3, 2)  # b g L n
    xg = jnp.repeat(xg, rep, axis=1)                        # b H L n
    xr = xg.transpose(0, 1, 3, 2).reshape(Bsz, D_INNER, L)  # b d L

    # causal depthwise conv + SiLU
    xpad = jnp.pad(xr, ((0, 0), (0, 0), (D_CONV - 1, 0)))
    conv = p["conv_b"][None, :, None]
    for k in range(D_CONV):
        conv = conv + p["conv_w"][None, :, k, None] * xpad[:, :, k:k + L]
    xc = _silu(conv)

    delta = _softplus(dt_t + p["dt_bias"][None, :, None])
    A = -jnp.exp(p["A_log"])                                 # (d_inner, N)
    Bexp = jnp.repeat(Bh, N, axis=1)                         # b d n L
    Cexp = jnp.repeat(Ch, N, axis=1)                         # b d n L

    state = jnp.zeros((Bsz, D_INNER, N), jnp.float32)
    ys = []
    for t in range(L):
        dA = jnp.exp(delta[:, :, t, None] * A[None])
        dBx = delta[:, :, t, None] * Bexp[:, :, :, t] * xc[:, :, t, None]
        state = dA * state + dBx
        ys.append(jnp.sum(state * Cexp[:, :, :, t], axis=-1))
    y = jnp.stack(ys, axis=-1)                               # b d L
    y = y + xc * p["D"][None, :, None]
    y = y * _silu(z_t)
    return jnp.einsum("bdl,md->blm", y, p["W_out"], precision=HI)


# ------------------------ deterministic parameter init -----------------------
def init_params(key):
    ks = jax.random.split(key, 8)
    kin = 1.0 / math.sqrt(D_MODEL)
    W_in = jax.random.uniform(ks[0], (D_PROJ, D_MODEL), jnp.float32, -kin, kin)

    dt_init_std = DT_RANK ** (-0.5)
    W_dt = jax.random.uniform(ks[1], (D_INNER, DT_RANK), jnp.float32,
                              -dt_init_std, dt_init_std)
    dt = jnp.exp(jax.random.uniform(ks[2], (D_INNER,), jnp.float32)
                 * (math.log(DT_MAX) - math.log(DT_MIN)) + math.log(DT_MIN))
    dt = jnp.maximum(dt, DT_INIT_FLOOR)
    dt_bias = dt + jnp.log(-jnp.expm1(-dt))                  # inv softplus

    kconv = 1.0 / math.sqrt(D_CONV)
    conv_w = jax.random.uniform(ks[3], (D_INNER, D_CONV), jnp.float32, -kconv, kconv)
    conv_b = jax.random.uniform(ks[4], (D_INNER,), jnp.float32, -kconv, kconv)

    A_log = jnp.log(jnp.tile(jnp.arange(1, D_STATE + 1, dtype=jnp.float32)[None, :],
                             (D_INNER, 1)))
    Dvec = jnp.ones((D_INNER,), jnp.float32)

    kout = 1.0 / math.sqrt(D_INNER)
    W_out = jax.random.uniform(ks[5], (D_MODEL, D_INNER), jnp.float32, -kout, kout)

    return {"W_in": W_in, "W_dt": W_dt, "dt_bias": dt_bias,
            "conv_w": conv_w, "conv_b": conv_b, "A_log": A_log,
            "D": Dvec, "W_out": W_out}, ks[6]


# ---------------------------------- main -------------------------------------
if __name__ == "__main__":
    params, hkey = init_params(jax.random.PRNGKey(0))
    hidden_states = jax.random.normal(hkey, (BATCH, SEQLEN, D_MODEL), jnp.float32)

    out = jax.block_until_ready(mamba_forward(hidden_states, params))

    ref = jax.block_until_ready(mamba_reference(hidden_states, params))
    np.testing.assert_allclose(np.asarray(out), np.asarray(ref),
                               rtol=2e-3, atol=2e-3)
    assert out.shape == hidden_states.shape
    print("KERNEL_OK")
</pallas_src>

<mosaic_0001>
module attributes {stable_mosaic.version = 11 : i64} {
  func.func @mamba_kernel(%arg0: i32, %arg1: memref<2x8x32xf32, #tpu.memory_space<vmem>>, %arg2: memref<32x192xf32, #tpu.memory_space<vmem>>, %arg3: memref<96x32xf32, #tpu.memory_space<vmem>>, %arg4: memref<1x128xf32, #tpu.memory_space<vmem>>, %arg5: memref<4x128xf32, #tpu.memory_space<vmem>>, %arg6: memref<1x128xf32, #tpu.memory_space<vmem>>, %arg7: memref<16x128xf32, #tpu.memory_space<vmem>>, %arg8: memref<1x128xf32, #tpu.memory_space<vmem>>, %arg9: memref<128x64xf32, #tpu.memory_space<vmem>>, %arg10: memref<2x8x32xf32, #tpu.memory_space<vmem>>) attributes {dimension_semantics = [#tpu.dimension_semantics<parallel>], iteration_bounds = array<i64: 1>, scalar_prefetch = 0 : i64, scratch_operands = 0 : i64, tpu.core_type = #tpu.core_type<tc>, window_params = [{transform_indices = @transform_0, window_bounds = array<i64: 2, 8, 32>}, {pipeline_mode = #tpu.pipeline_mode<synchronous>, transform_indices = @transform_1, window_bounds = array<i64: 32, 192>}, {pipeline_mode = #tpu.pipeline_mode<synchronous>, transform_indices = @transform_2, window_bounds = array<i64: 96, 32>}, {pipeline_mode = #tpu.pipeline_mode<synchronous>, transform_indices = @transform_3, window_bounds = array<i64: 1, 128>}, {pipeline_mode = #tpu.pipeline_mode<synchronous>, transform_indices = @transform_4, window_bounds = array<i64: 4, 128>}, {pipeline_mode = #tpu.pipeline_mode<synchronous>, transform_indices = @transform_5, window_bounds = array<i64: 1, 128>}, {pipeline_mode = #tpu.pipeline_mode<synchronous>, transform_indices = @transform_6, window_bounds = array<i64: 16, 128>}, {pipeline_mode = #tpu.pipeline_mode<synchronous>, transform_indices = @transform_7, window_bounds = array<i64: 1, 128>}, {pipeline_mode = #tpu.pipeline_mode<synchronous>, transform_indices = @transform_8, window_bounds = array<i64: 128, 64>}, {transform_indices = @transform_9, window_bounds = array<i64: 2, 8, 32>}]} {
    %c0 = arith.constant 0 : index
    %c0_0 = arith.constant 0 : index
    %c0_1 = arith.constant 0 : index
    %0 = vector.load %arg1[%c0, %c0_0, %c0_1] : memref<2x8x32xf32, #tpu.memory_space<vmem>>, vector<2x8x32xf32>
    %1 = vector.shape_cast %0 : vector<2x8x32xf32> to vector<16x32xf32>
    %c0_2 = arith.constant 0 : index
    %c0_3 = arith.constant 0 : index
    %2 = vector.load %arg2[%c0_2, %c0_3] : memref<32x192xf32, #tpu.memory_space<vmem>>, vector<32x192xf32>
    %cst = arith.constant dense<0.000000e+00> : vector<16x192xf32>
    %3 = tpu.matmul %1, %2, %cst {dimension_numbers = #tpu.dot_dimension_numbers<[1], [0], [0], [1], [0, 0, 1, 1], [], []>} : vector<16x32xf32>, vector<32x192xf32>, vector<16x192xf32> -> vector<16x192xf32>
    %4 = vector.extract_strided_slice %3 {offsets = [0, 0], sizes = [8, 64], strides = [1, 1]} : vector<16x192xf32> to vector<8x64xf32>
    %5 = vector.extract_strided_slice %3 {offsets = [8, 0], sizes = [8, 64], strides = [1, 1]} : vector<16x192xf32> to vector<8x64xf32>
    %6 = tpu.concatenate %4, %5 in 1 : vector<8x64xf32>, vector<8x64xf32> -> vector<8x128xf32>
    %7 = vector.extract_strided_slice %3 {offsets = [0, 64], sizes = [8, 64], strides = [1, 1]} : vector<16x192xf32> to vector<8x64xf32>
    %8 = vector.extract_strided_slice %3 {offsets = [8, 64], sizes = [8, 64], strides = [1, 1]} : vector<16x192xf32> to vector<8x64xf32>
    %9 = tpu.concatenate %7, %8 in 1 : vector<8x64xf32>, vector<8x64xf32> -> vector<8x128xf32>
    %10 = vector.extract_strided_slice %3 {offsets = [0, 128], sizes = [8, 64], strides = [1, 1]} : vector<16x192xf32> to vector<8x64xf32>
    %11 = vector.extract_strided_slice %3 {offsets = [8, 128], sizes = [8, 64], strides = [1, 1]} : vector<16x192xf32> to vector<8x64xf32>
    %12 = tpu.concatenate %10, %11 in 1 : vector<8x64xf32>, vector<8x64xf32> -> vector<8x128xf32>
    %c0_4 = arith.constant 0 : index
    %c0_5 = arith.constant 0 : index
    %13 = vector.load %arg3[%c0_4, %c0_5] : memref<96x32xf32, #tpu.memory_space<vmem>>, vector<96x32xf32>
    %cst_6 = arith.constant dense<0.000000e+00> : vector<96x16xf32>
    %14 = tpu.matmul %13, %1, %cst_6 {dimension_numbers = #tpu.dot_dimension_numbers<[1], [1], [0], [0], [0, 0, 1, 0], [], []>} : vector<96x32xf32>, vector<16x32xf32>, vector<96x16xf32> -> vector<96x16xf32>
    %c3 = arith.constant 3 : index
    %c0_7 = arith.constant 0 : index
    %15 = vector.load %arg5[%c3, %c0_7] : memref<4x128xf32, #tpu.memory_space<vmem>>, vector<1x128xf32>
    %16 = vector.broadcast %15 : vector<1x128xf32> to vector<8x128xf32>
    %17 = arith.mulf %16, %9 : vector<8x128xf32>
    %cst_8 = arith.constant 0.000000e+00 : f32
    %18 = vector.broadcast %cst_8 : f32 to vector<3x128xf32>
    %19 = vector.extract_strided_slice %9 {offsets = [0, 0], sizes = [5, 128], strides = [1, 1]} : vector<8x128xf32> to vector<5x128xf32>
    %20 = tpu.concatenate %18, %19 in 0 : vector<3x128xf32>, vector<5x128xf32> -> vector<8x128xf32>
    %c0_9 = arith.constant 0 : index
    %c0_10 = arith.constant 0 : index
    %21 = vector.load %arg5[%c0_9, %c0_10] : memref<4x128xf32, #tpu.memory_space<vmem>>, vector<1x128xf32>
    %22 = vector.broadcast %21 : vector<1x128xf32> to vector<8x128xf32>
    %23 = arith.mulf %22, %20 : vector<8x128xf32>
    %24 = arith.addf %17, %23 : vector<8x128xf32>
    %cst_11 = arith.constant 0.000000e+00 : f32
    %25 = vector.broadcast %cst_11 : f32 to vector<2x128xf32>
    %26 = vector.extract_strided_slice %9 {offsets = [0, 0], sizes = [6, 128], strides = [1, 1]} : vector<8x128xf32> to vector<6x128xf32>
    %27 = tpu.concatenate %25, %26 in 0 : vector<2x128xf32>, vector<6x128xf32> -> vector<8x128xf32>
    %c1 = arith.constant 1 : index
    %c0_12 = arith.constant 0 : index
    %28 = vector.load %arg5[%c1, %c0_12] : memref<4x128xf32, #tpu.memory_space<vmem>>, vector<1x128xf32>
    %29 = vector.broadcast %28 : vector<1x128xf32> to vector<8x128xf32>
    %30 = arith.mulf %29, %27 : vector<8x128xf32>
    %31 = arith.addf %24, %30 : vector<8x128xf32>
    %cst_13 = arith.constant 0.000000e+00 : f32
    %32 = vector.broadcast %cst_13 : f32 to vector<1x128xf32>
    %33 = vector.extract_strided_slice %9 {offsets = [0, 0], sizes = [7, 128], strides = [1, 1]} : vector<8x128xf32> to vector<7x128xf32>
    %34 = tpu.concatenate %32, %33 in 0 : vector<1x128xf32>, vector<7x128xf32> -> vector<8x128xf32>
    %c2 = arith.constant 2 : index
    %c0_14 = arith.constant 0 : index
    %35 = vector.load %arg5[%c2, %c0_14] : memref<4x128xf32, #tpu.memory_space<vmem>>, vector<1x128xf32>
    %36 = vector.broadcast %35 : vector<1x128xf32> to vector<8x128xf32>
    %37 = arith.mulf %36, %34 : vector<8x128xf32>
    %38 = arith.addf %31, %37 : vector<8x128xf32>
    %c0_15 = arith.constant 0 : index
    %c0_16 = arith.constant 0 : index
    %39 = vector.load %arg6[%c0_15, %c0_16] : memref<1x128xf32, #tpu.memory_space<vmem>>, vector<1x128xf32>
    %40 = vector.broadcast %39 : vector<1x128xf32> to vector<8x128xf32>
    %41 = arith.addf %38, %40 : vector<8x128xf32>
    %cst_17 = arith.constant 0.000000e+00 : f32
    %42 = vector.broadcast %cst_17 : f32 to vector<8x128xf32>
    %43 = arith.subf %42, %41 : vector<8x128xf32>
    %44 = math.exp %43 : vector<8x128xf32>
    %cst_18 = arith.constant 1.000000e+00 : f32
    %45 = vector.broadcast %cst_18 : f32 to vector<8x128xf32>
    %46 = arith.addf %45, %44 : vector<8x128xf32>
    %cst_19 = arith.constant 1.000000e+00 : f32
    %47 = vector.broadcast %cst_19 : f32 to vector<8x128xf32>
    %48 = arith.divf %47, %46 : vector<8x128xf32>
    %49 = arith.mulf %41, %48 : vector<8x128xf32>
    %c0_20 = arith.constant 0 : index
    %c0_21 = arith.constant 0 : index
    %50 = vector.load %arg4[%c0_20, %c0_21] : memref<1x128xf32, #tpu.memory_space<vmem>>, vector<1x128xf32>
    %51 = vector.broadcast %50 : vector<1x128xf32> to vector<8x128xf32>
    %52 = arith.addf %12, %51 : vector<8x128xf32>
    %cst_22 = arith.constant 2.000000e+01 : f32
    %53 = vector.broadcast %cst_22 : f32 to vector<8x128xf32>
    %54 = arith.cmpf ogt, %52, %53 : vector<8x128xf32>
    %cst_23 = arith.constant 2.000000e+01 : f32
    %55 = vector.broadcast %cst_23 : f32 to vector<8x128xf32>
    %56 = arith.minimumf %52, %55 : vector<8x128xf32>
    %57 = math.exp %56 : vector<8x128xf32>
    %cst_24 = arith.constant 1.000000e+00 : f32
    %58 = vector.broadcast %cst_24 : f32 to vector<8x128xf32>
    %59 = arith.addf %58, %57 : vector<8x128xf32>
    %60 = math.log %59 : vector<8x128xf32>
    %61 = arith.select %54, %52, %60 : vector<8x128xi1>, vector<8x128xf32>
    %62 = arith.mulf %61, %49 : vector<8x128xf32>
    %c0_25 = arith.constant 0 : index
    %c0_26 = arith.constant 0 : index
    %63 = vector.load %arg7[%c0_25, %c0_26] : memref<16x128xf32, #tpu.memory_space<vmem>>, vector<16x128xf32>
    %64 = tpu.iota {dimensions = array<i32: 1>} : vector<16x128xi32>
    %cst_27 = arith.constant 0.000000e+00 : f32
    %65 = vector.broadcast %cst_27 : f32 to vector<16x128xf32>
    %66 = vector.extract_strided_slice %61 {offsets = [0, 0], sizes = [1, 128], strides = [1, 1]} : vector<8x128xf32> to vector<1x128xf32>
    %67 = vector.broadcast %66 : vector<1x128xf32> to vector<16x128xf32>
    %68 = arith.mulf %67, %63 : vector<16x128xf32>
    %69 = math.exp %68 : vector<16x128xf32>
    %70 = vector.extract_strided_slice %14 {offsets = [0, 0], sizes = [16, 1], strides = [1, 1]} : vector<96x16xf32> to vector<16x1xf32>
    %71 = vector.extract_strided_slice %14 {offsets = [16, 0], sizes = [16, 1], strides = [1, 1]} : vector<96x16xf32> to vector<16x1xf32>
    %72 = vector.extract_strided_slice %14 {offsets = [0, 8], sizes = [16, 1], strides = [1, 1]} : vector<96x16xf32> to vector<16x1xf32>
    %73 = vector.extract_strided_slice %14 {offsets = [16, 8], sizes = [16, 1], strides = [1, 1]} : vector<96x16xf32> to vector<16x1xf32>
    %74 = vector.extract_strided_slice %14 {offsets = [32, 0], sizes = [16, 1], strides = [1, 1]} : vector<96x16xf32> to vector<16x1xf32>
    %75 = vector.extract_strided_slice %14 {offsets = [48, 0], sizes = [16, 1], strides = [1, 1]} : vector<96x16xf32> to vector<16x1xf32>
    %76 = vector.extract_strided_slice %14 {offsets = [64, 0], sizes = [16, 1], strides = [1, 1]} : vector<96x16xf32> to vector<16x1xf32>
    %77 = vector.extract_strided_slice %14 {offsets = [80, 0], sizes = [16, 1], strides = [1, 1]} : vector<96x16xf32> to vector<16x1xf32>
    %78 = vector.extract_strided_slice %14 {offsets = [32, 8], sizes = [16, 1], strides = [1, 1]} : vector<96x16xf32> to vector<16x1xf32>
    %79 = vector.extract_strided_slice %14 {offsets = [48, 8], sizes = [16, 1], strides = [1, 1]} : vector<96x16xf32> to vector<16x1xf32>
    %80 = vector.extract_strided_slice %14 {offsets = [64, 8], sizes = [16, 1], strides = [1, 1]} : vector<96x16xf32> to vector<16x1xf32>
    %81 = vector.extract_strided_slice %14 {offsets = [80, 8], sizes = [16, 1], strides = [1, 1]} : vector<96x16xf32> to vector<16x1xf32>
    %c96_i32 = arith.constant 96 : i32
    %82 = vector.broadcast %c96_i32 : i32 to vector<16x128xi32>
    %83 = arith.cmpi slt, %64, %82 : vector<16x128xi32>
    %84 = vector.shape_cast %72 : vector<16x1xf32> to vector<16x1xf32>
    %85 = vector.broadcast %84 : vector<16x1xf32> to vector<16x128xf32>
    %86 = vector.shape_cast %73 : vector<16x1xf32> to vector<16x1xf32>
    %87 = vector.broadcast %86 : vector<16x1xf32> to vector<16x128xf32>
    %88 = arith.select %83, %85, %87 : vector<16x128xi1>, vector<16x128xf32>
    %c64_i32 = arith.constant 64 : i32
    %89 = vector.broadcast %c64_i32 : i32 to vector<16x128xi32>
    %90 = arith.cmpi slt, %64, %89 : vector<16x128xi32>
    %91 = vector.shape_cast %71 : vector<16x1xf32> to vector<16x1xf32>
    %92 = vector.broadcast %91 : vector<16x1xf32> to vector<16x128xf32>
    %93 = arith.select %90, %92, %88 : vector<16x128xi1>, vector<16x128xf32>
    %c32_i32 = arith.constant 32 : i32
    %94 = vector.broadcast %c32_i32 : i32 to vector<16x128xi32>
    %95 = arith.cmpi slt, %64, %94 : vector<16x128xi32>
    %96 = vector.shape_cast %70 : vector<16x1xf32> to vector<16x1xf32>
    %97 = vector.broadcast %96 : vector<16x1xf32> to vector<16x128xf32>
    %98 = arith.select %95, %97, %93 : vector<16x128xi1>, vector<16x128xf32>
    %c112_i32 = arith.constant 112 : i32
    %99 = vector.broadcast %c112_i32 : i32 to vector<16x128xi32>
    %100 = arith.cmpi slt, %64, %99 : vector<16x128xi32>
    %101 = vector.shape_cast %80 : vector<16x1xf32> to vector<16x1xf32>
    %102 = vector.broadcast %101 : vector<16x1xf32> to vector<16x128xf32>
    %103 = vector.shape_cast %81 : vector<16x1xf32> to vector<16x1xf32>
    %104 = vector.broadcast %103 : vector<16x1xf32> to vector<16x128xf32>
    %105 = arith.select %100, %102, %104 : vector<16x128xi1>, vector<16x128xf32>
    %c96_i32_28 = arith.constant 96 : i32
    %106 = vector.broadcast %c96_i32_28 : i32 to vector<16x128xi32>
    %107 = arith.cmpi slt, %64, %106 : vector<16x128xi32>
    %108 = vector.shape_cast %79 : vector<16x1xf32> to vector<16x1xf32>
    %109 = vector.broadcast %108 : vector<16x1xf32> to vector<16x128xf32>
    %110 = arith.select %107, %109, %105 : vector<16x128xi1>, vector<16x128xf32>
    %c80_i32 = arith.constant 80 : i32
    %111 = vector.broadcast %c80_i32 : i32 to vector<16x128xi32>
    %112 = arith.cmpi slt, %64, %111 : vector<16x128xi32>
    %113 = vector.shape_cast %78 : vector<16x1xf32> to vector<16x1xf32>
    %114 = vector.broadcast %113 : vector<16x1xf32> to vector<16x128xf32>
    %115 = arith.select %112, %114, %110 : vector<16x128xi1>, vector<16x128xf32>
    %c64_i32_29 = arith.constant 64 : i32
    %116 = vector.broadcast %c64_i32_29 : i32 to vector<16x128xi32>
    %117 = arith.cmpi slt, %64, %116 : vector<16x128xi32>
    %118 = vector.shape_cast %77 : vector<16x1xf32> to vector<16x1xf32>
    %119 = vector.broadcast %118 : vector<16x1xf32> to vector<16x128xf32>
    %120 = arith.select %117, %119, %115 : vector<16x128xi1>, vector<16x128xf32>
    %c48_i32 = arith.constant 48 : i32
    %121 = vector.broadcast %c48_i32 : i32 to vector<16x128xi32>
    %122 = arith.cmpi slt, %64, %121 : vector<16x128xi32>
    %123 = vector.shape_cast %76 : vector<16x1xf32> to vector<16x1xf32>
    %124 = vector.broadcast %123 : vector<16x1xf32> to vector<16x128xf32>
    %125 = arith.select %122, %124, %120 : vector<16x128xi1>, vector<16x128xf32>
    %c32_i32_30 = arith.constant 32 : i32
    %126 = vector.broadcast %c32_i32_30 : i32 to vector<16x128xi32>
    %127 = arith.cmpi slt, %64, %126 : vector<16x128xi32>
    %128 = vector.shape_cast %75 : vector<16x1xf32> to vector<16x1xf32>
    %129 = vector.broadcast %128 : vector<16x1xf32> to vector<16x128xf32>
    %130 = arith.select %127, %129, %125 : vector<16x128xi1>, vector<16x128xf32>
    %c16_i32 = arith.constant 16 : i32
    %131 = vector.broadcast %c16_i32 : i32 to vector<16x128xi32>
    %132 = arith.cmpi slt, %64, %131 : vector<16x128xi32>
    %133 = vector.shape_cast %74 : vector<16x1xf32> to vector<16x1xf32>
    %134 = vector.broadcast %133 : vector<16x1xf32> to vector<16x128xf32>
    %135 = arith.select %132, %134, %130 : vector<16x128xi1>, vector<16x128xf32>
    %136 = arith.mulf %69, %65 : vector<16x128xf32>
    %137 = vector.extract_strided_slice %62 {offsets = [0, 0], sizes = [1, 128], strides = [1, 1]} : vector<8x128xf32> to vector<1x128xf32>
    %138 = vector.broadcast %137 : vector<1x128xf32> to vector<16x128xf32>
    %139 = arith.mulf %138, %98 : vector<16x128xf32>
    %140 = arith.addf %136, %139 : vector<16x128xf32>
    %141 = arith.mulf %140, %135 : vector<16x128xf32>
    %cst_31 = arith.constant dense<0.000000e+00> : vector<128xf32>
    %142 = vector.multi_reduction <add>, %141, %cst_31 [0] : vector<16x128xf32> to vector<128xf32>
    %143 = vector.shape_cast %142 : vector<128xf32> to vector<1x128xf32>
    %144 = vector.extract_strided_slice %61 {offsets = [1, 0], sizes = [1, 128], strides = [1, 1]} : vector<8x128xf32> to vector<1x128xf32>
    %145 = vector.broadcast %144 : vector<1x128xf32> to vector<16x128xf32>
    %146 = arith.mulf %145, %63 : vector<16x128xf32>
    %147 = math.exp %146 : vector<16x128xf32>
    %148 = vector.extract_strided_slice %14 {offsets = [0, 1], sizes = [16, 1], strides = [1, 1]} : vector<96x16xf32> to vector<16x1xf32>
    %149 = vector.extract_strided_slice %14 {offsets = [16, 1], sizes = [16, 1], strides = [1, 1]} : vector<96x16xf32> to vector<16x1xf32>
    %150 = vector.extract_strided_slice %14 {offsets = [0, 9], sizes = [16, 1], strides = [1, 1]} : vector<96x16xf32> to vector<16x1xf32>
    %151 = vector.extract_strided_slice %14 {offsets = [16, 9], sizes = [16, 1], strides = [1, 1]} : vector<96x16xf32> to vector<16x1xf32>
    %152 = vector.extract_strided_slice %14 {offsets = [32, 1], sizes = [16, 1], strides = [1, 1]} : vector<96x16xf32> to vector<16x1xf32>
    %153 = vector.extract_strided_slice %14 {offsets = [48, 1], sizes = [16, 1], strides = [1, 1]} : vector<96x16xf32> to vector<16x1xf32>
    %154 = vector.extract_strided_slice %14 {offsets = [64, 1], sizes = [16, 1], strides = [1, 1]} : vector<96x16xf32> to vector<16x1xf32>
    %155 = vector.extract_strided_slice %14 {offsets = [80, 1], sizes = [16, 1], strides = [1, 1]} : vector<96x16xf32> to vector<16x1xf32>
    %156 = vector.extract_strided_slice %14 {offsets = [32, 9], sizes = [16, 1], strides = [1, 1]} : vector<96x16xf32> to vector<16x1xf32>
    %157 = vector.extract_strided_slice %14 {offsets = [48, 9], sizes = [16, 1], strides = [1, 1]} : vector<96x16xf32> to vector<16x1xf32>
    %158 = vector.extract_strided_slice %14 {offsets = [64, 9], sizes = [16, 1], strides = [1, 1]} : vector<96x16xf32> to vector<16x1xf32>
    %159 = vector.extract_strided_slice %14 {offsets = [80, 9], sizes = [16, 1], strides = [1, 1]} : vector<96x16xf32> to vector<16x1xf32>
    %c96_i32_32 = arith.constant 96 : i32
    %160 = vector.broadcast %c96_i32_32 : i32 to vector<16x128xi32>
    %161 = arith.cmpi slt, %64, %160 : vector<16x128xi32>
    %162 = vector.shape_cast %150 : vector<16x1xf32> to vector<16x1xf32>
    %163 = vector.broadcast %162 : vector<16x1xf32> to vector<16x128xf32>
    %164 = vector.shape_cast %151 : vector<16x1xf32> to vector<16x1xf32>
    %165 = vector.broadcast %164 : vector<16x1xf32> to vector<16x128xf32>
    %166 = arith.select %161, %163, %165 : vector<16x128xi1>, vector<16x128xf32>
    %c64_i32_33 = arith.constant 64 : i32
    %167 = vector.broadcast %c64_i32_33 : i32 to vector<16x128xi32>
    %168 = arith.cmpi slt, %64, %167 : vector<16x128xi32>
    %169 = vector.shape_cast %149 : vector<16x1xf32> to vector<16x1xf32>
    %170 = vector.broadcast %169 : vector<16x1xf32> to vector<16x128xf32>
    %171 = arith.select %168, %170, %166 : vector<16x128xi1>, vector<16x128xf32>
    %c32_i32_34 = arith.constant 32 : i32
    %172 = vector.broadcast %c32_i32_34 : i32 to vector<16x128xi32>
    %173 = arith.cmpi slt, %64, %172 : vector<16x128xi32>
    %174 = vector.shape_cast %148 : vector<16x1xf32> to vector<16x1xf32>
    %175 = vector.broadcast %174 : vector<16x1xf32> to vector<16x128xf32>
    %176 = arith.select %173, %175, %171 : vector<16x128xi1>, vector<16x128xf32>
    %c112_i32_35 = arith.constant 112 : i32
    %177 = vector.broadcast %c112_i32_35 : i32 to vector<16x128xi32>
    %178 = arith.cmpi slt, %64, %177 : vector<16x128xi32>
    %179 = vector.shape_cast %158 : vector<16x1xf32> to vector<16x1xf32>
    %180 = vector.broadcast %179 : vector<16x1xf32> to vector<16x128xf32>
    %181 = vector.shape_cast %159 : vector<16x1xf32> to vector<16x1xf32>
    %182 = vector.broadcast %181 : vector<16x1xf32> to vector<16x128xf32>
    %183 = arith.select %178, %180, %182 : vector<16x128xi1>, vector<16x128xf32>
    %c96_i32_36 = arith.constant 96 : i32
    %184 = vector.broadcast %c96_i32_36 : i32 to vector<16x128xi32>
    %185 = arith.cmpi slt, %64, %184 : vector<16x128xi32>
    %186 = vector.shape_cast %157 : vector<16x1xf32> to vector<16x1xf32>
    %187 = vector.broadcast %186 : vector<16x1xf32> to vector<16x128xf32>
    %188 = arith.select %185, %187, %183 : vector<16x128xi1>, vector<16x128xf32>
    %c80_i32_37 = arith.constant 80 : i32
    %189 = vector.broadcast %c80_i32_37 : i32 to vector<16x128xi32>
    %190 = arith.cmpi slt, %64, %189 : vector<16x128xi32>
    %191 = vector.shape_cast %156 : vector<16x1xf32> to vector<16x1xf32>
    %192 = vector.broadcast %191 : vector<16x1xf32> to vector<16x128xf32>
    %193 = arith.select %190, %192, %188 : vector<16x128xi1>, vector<16x128xf32>
    %c64_i32_38 = arith.constant 64 : i32
    %194 = vector.broadcast %c64_i32_38 : i32 to vector<16x128xi32>
    %195 = arith.cmpi slt, %64, %194 : vector<16x128xi32>
    %196 = vector.shape_cast %155 : vector<16x1xf32> to vector<16x1xf32>
    %197 = vector.broadcast %196 : vector<16x1xf32> to vector<16x128xf32>
    %198 = arith.select %195, %197, %193 : vector<16x128xi1>, vector<16x128xf32>
    %c48_i32_39 = arith.constant 48 : i32
    %199 = vector.broadcast %c48_i32_39 : i32 to vector<16x128xi32>
    %200 = arith.cmpi slt, %64, %199 : vector<16x128xi32>
    %201 = vector.shape_cast %154 : vector<16x1xf32> to vector<16x1xf32>
    %202 = vector.broadcast %201 : vector<16x1xf32> to vector<16x128xf32>
    %203 = arith.select %200, %202, %198 : vector<16x128xi1>, vector<16x128xf32>
    %c32_i32_40 = arith.constant 32 : i32
    %204 = vector.broadcast %c32_i32_40 : i32 to vector<16x128xi32>
    %205 = arith.cmpi slt, %64, %204 : vector<16x128xi32>
    %206 = vector.shape_cast %153 : vector<16x1xf32> to vector<16x1xf32>
    %207 = vector.broadcast %206 : vector<16x1xf32> to vector<16x128xf32>
    %208 = arith.select %205, %207, %203 : vector<16x128xi1>, vector<16x128xf32>
    %c16_i32_41 = arith.constant 16 : i32
    %209 = vector.broadcast %c16_i32_41 : i32 to vector<16x128xi32>
    %210 = arith.cmpi slt, %64, %209 : vector<16x128xi32>
    %211 = vector.shape_cast %152 : vector<16x1xf32> to vector<16x1xf32>
    %212 = vector.broadcast %211 : vector<16x1xf32> to vector<16x128xf32>
    %213 = arith.select %210, %212, %208 : vector<16x128xi1>, vector<16x128xf32>
    %214 = arith.mulf %147, %140 : vector<16x128xf32>
    %215 = vector.extract_strided_slice %62 {offsets = [1, 0], sizes = [1, 128], strides = [1, 1]} : vector<8x128xf32> to vector<1x128xf32>
    %216 = vector.broadcast %215 : vector<1x128xf32> to vector<16x128xf32>
    %217 = arith.mulf %216, %176 : vector<16x128xf32>
    %218 = arith.addf %214, %217 : vector<16x128xf32>
    %219 = arith.mulf %218, %213 : vector<16x128xf32>
    %cst_42 = arith.constant dense<0.000000e+00> : vector<128xf32>
    %220 = vector.multi_reduction <add>, %219, %cst_42 [0] : vector<16x128xf32> to vector<128xf32>
    %221 = vector.shape_cast %220 : vector<128xf32> to vector<1x128xf32>
    %222 = vector.extract_strided_slice %61 {offsets = [2, 0], sizes = [1, 128], strides = [1, 1]} : vector<8x128xf32> to vector<1x128xf32>
    %223 = vector.broadcast %222 : vector<1x128xf32> to vector<16x128xf32>
    %224 = arith.mulf %223, %63 : vector<16x128xf32>
    %225 = math.exp %224 : vector<16x128xf32>
    %226 = vector.extract_strided_slice %14 {offsets = [0, 2], sizes = [16, 1], strides = [1, 1]} : vector<96x16xf32> to vector<16x1xf32>
    %227 = vector.extract_strided_slice %14 {offsets = [16, 2], sizes = [16, 1], strides = [1, 1]} : vector<96x16xf32> to vector<16x1xf32>
    %228 = vector.extract_strided_slice %14 {offsets = [0, 10], sizes = [16, 1], strides = [1, 1]} : vector<96x16xf32> to vector<16x1xf32>
    %229 = vector.extract_strided_slice %14 {offsets = [16, 10], sizes = [16, 1], strides = [1, 1]} : vector<96x16xf32> to vector<16x1xf32>
    %230 = vector.extract_strided_slice %14 {offsets = [32, 2], sizes = [16, 1], strides = [1, 1]} : vector<96x16xf32> to vector<16x1xf32>
    %231 = vector.extract_strided_slice %14 {offsets = [48, 2], sizes = [16, 1], strides = [1, 1]} : vector<96x16xf32> to vector<16x1xf32>
    %232 = vector.extract_strided_slice %14 {offsets = [64, 2], sizes = [16, 1], strides = [1, 1]} : vector<96x16xf32> to vector<16x1xf32>
    %233 = vector.extract_strided_slice %14 {offsets = [80, 2], sizes = [16, 1], strides = [1, 1]} : vector<96x16xf32> to vector<16x1xf32>
    %234 = vector.extract_strided_slice %14 {offsets = [32, 10], sizes = [16, 1], strides = [1, 1]} : vector<96x16xf32> to vector<16x1xf32>
    %235 = vector.extract_strided_slice %14 {offsets = [48, 10], sizes = [16, 1], strides = [1, 1]} : vector<96x16xf32> to vector<16x1xf32>
    %236 = vector.extract_strided_slice %14 {offsets = [64, 10], sizes = [16, 1], strides = [1, 1]} : vector<96x16xf32> to vector<16x1xf32>
    %237 = vector.extract_strided_slice %14 {offsets = [80, 10], sizes = [16, 1], strides = [1, 1]} : vector<96x16xf32> to vector<16x1xf32>
    %c96_i32_43 = arith.constant 96 : i32
    %238 = vector.broadcast %c96_i32_43 : i32 to vector<16x128xi32>
    %239 = arith.cmpi slt, %64, %238 : vector<16x128xi32>
    %240 = vector.shape_cast %228 : vector<16x1xf32> to vector<16x1xf32>
    %241 = vector.broadcast %240 : vector<16x1xf32> to vector<16x128xf32>
    %242 = vector.shape_cast %229 : vector<16x1xf32> to vector<16x1xf32>
    %243 = vector.broadcast %242 : vector<16x1xf32> to vector<16x128xf32>
    %244 = arith.select %239, %241, %243 : vector<16x128xi1>, vector<16x128xf32>
    %c64_i32_44 = arith.constant 64 : i32
    %245 = vector.broadcast %c64_i32_44 : i32 to vector<16x128xi32>
    %246 = arith.cmpi slt, %64, %245 : vector<16x128xi32>
    %247 = vector.shape_cast %227 : vector<16x1xf32> to vector<16x1xf32>
    %248 = vector.broadcast %247 : vector<16x1xf32> to vector<16x128xf32>
    %249 = arith.select %246, %248, %244 : vector<16x128xi1>, vector<16x128xf32>
    %c32_i32_45 = arith.constant 32 : i32
    %250 = vector.broadcast %c32_i32_45 : i32 to vector<16x128xi32>
    %251 = arith.cmpi slt, %64, %250 : vector<16x128xi32>
    %252 = vector.shape_cast %226 : vector<16x1xf32> to vector<16x1xf32>
    %253 = vector.broadcast %252 : vector<16x1xf32> to vector<16x128xf32>
    %254 = arith.select %251, %253, %249 : vector<16x128xi1>, vector<16x128xf32>
    %c112_i32_46 = arith.constant 112 : i32
    %255 = vector.broadcast %c112_i32_46 : i32 to vector<16x128xi32>
    %256 = arith.cmpi slt, %64, %255 : vector<16x128xi32>
    %257 = vector.shape_cast %236 : vector<16x1xf32> to vector<16x1xf32>
    %258 = vector.broadcast %257 : vector<16x1xf32> to vector<16x128xf32>
    %259 = vector.shape_cast %237 : vector<16x1xf32> to vector<16x1xf32>
    %260 = vector.broadcast %259 : vector<16x1xf32> to vector<16x128xf32>
    %261 = arith.select %256, %258, %260 : vector<16x128xi1>, vector<16x128xf32>
    %c96_i32_47 = arith.constant 96 : i32
    %262 = vector.broadcast %c96_i32_47 : i32 to vector<16x128xi32>
    %263 = arith.cmpi slt, %64, %262 : vector<16x128xi32>
    %264 = vector.shape_cast %235 : vector<16x1xf32> to vector<16x1xf32>
    %265 = vector.broadcast %264 : vector<16x1xf32> to vector<16x128xf32>
    %266 = arith.select %263, %265, %261 : vector<16x128xi1>, vector<16x128xf32>
    %c80_i32_48 = arith.constant 80 : i32
    %267 = vector.broadcast %c80_i32_48 : i32 to vector<16x128xi32>
    %268 = arith.cmpi slt, %64, %267 : vector<16x128xi32>
    %269 = vector.shape_cast %234 : vector<16x1xf32> to vector<16x1xf32>
    %270 = vector.broadcast %269 : vector<16x1xf32> to vector<16x128xf32>
    %271 = arith.select %268, %270, %266 : vector<16x128xi1>, vector<16x128xf32>
    %c64_i32_49 = arith.constant 64 : i32
    %272 = vector.broadcast %c64_i32_49 : i32 to vector<16x128xi32>
    %273 = arith.cmpi slt, %64, %272 : vector<16x128xi32>
    %274 = vector.shape_cast %233 : vector<16x1xf32> to vector<16x1xf32>
    %275 = vector.broadcast %274 : vector<16x1xf32> to vector<16x128xf32>
    %276 = arith.select %273, %275, %271 : vector<16x128xi1>, vector<16x128xf32>
    %c48_i32_50 = arith.constant 48 : i32
    %277 = vector.broadcast %c48_i32_50 : i32 to vector<16x128xi32>
    %278 = arith.cmpi slt, %64, %277 : vector<16x128xi32>
    %279 = vector.shape_cast %232 : vector<16x1xf32> to vector<16x1xf32>
    %280 = vector.broadcast %279 : vector<16x1xf32> to vector<16x128xf32>
    %281 = arith.select %278, %280, %276 : vector<16x128xi1>, vector<16x128xf32>
    %c32_i32_51 = arith.constant 32 : i32
    %282 = vector.broadcast %c32_i32_51 : i32 to vector<16x128xi32>
    %283 = arith.cmpi slt, %64, %282 : vector<16x128xi32>
    %284 = vector.shape_cast %231 : vector<16x1xf32> to vector<16x1xf32>
    %285 = vector.broadcast %284 : vector<16x1xf32> to vector<16x128xf32>
    %286 = arith.select %283, %285, %281 : vector<16x128xi1>, vector<16x128xf32>
    %c16_i32_52 = arith.constant 16 : i32
    %287 = vector.broadcast %c16_i32_52 : i32 to vector<16x128xi32>
    %288 = arith.cmpi slt, %64, %287 : vector<16x128xi32>
    %289 = vector.shape_cast %230 : vector<16x1xf32> to vector<16x1xf32>
    %290 = vector.broadcast %289 : vector<16x1xf32> to vector<16x128xf32>
    %291 = arith.select %288, %290, %286 : vector<16x128xi1>, vector<16x128xf32>
    %292 = arith.mulf %225, %218 : vector<16x128xf32>
    %293 = vector.extract_strided_slice %62 {offsets = [2, 0], sizes = [1, 128], strides = [1, 1]} : vector<8x128xf32> to vector<1x128xf32>
    %294 = vector.broadcast %293 : vector<1x128xf32> to vector<16x128xf32>
    %295 = arith.mulf %294, %254 : vector<16x128xf32>
    %296 = arith.addf %292, %295 : vector<16x128xf32>
    %297 = arith.mulf %296, %291 : vector<16x128xf32>
    %cst_53 = arith.constant dense<0.000000e+00> : vector<128xf32>
    %298 = vector.multi_reduction <add>, %297, %cst_53 [0] : vector<16x128xf32> to vector<128xf32>
    %299 = vector.shape_cast %298 : vector<128xf32> to vector<1x128xf32>
    %300 = vector.extract_strided_slice %61 {offsets = [3, 0], sizes = [1, 128], strides = [1, 1]} : vector<8x128xf32> to vector<1x128xf32>
    %301 = vector.broadcast %300 : vector<1x128xf32> to vector<16x128xf32>
    %302 = arith.mulf %301, %63 : vector<16x128xf32>
    %303 = math.exp %302 : vector<16x128xf32>
    %304 = vector.extract_strided_slice %14 {offsets = [0, 3], sizes = [16, 1], strides = [1, 1]} : vector<96x16xf32> to vector<16x1xf32>
    %305 = vector.extract_strided_slice %14 {offsets = [16, 3], sizes = [16, 1], strides = [1, 1]} : vector<96x16xf32> to vector<16x1xf32>
    %306 = vector.extract_strided_slice %14 {offsets = [0, 11], sizes = [16, 1], strides = [1, 1]} : vector<96x16xf32> to vector<16x1xf32>
    %307 = vector.extract_strided_slice %14 {offsets = [16, 11], sizes = [16, 1], strides = [1, 1]} : vector<96x16xf32> to vector<16x1xf32>
    %308 = vector.extract_strided_slice %14 {offsets = [32, 3], sizes = [16, 1], strides = [1, 1]} : vector<96x16xf32> to vector<16x1xf32>
    %309 = vector.extract_strided_slice %14 {offsets = [48, 3], sizes = [16, 1], strides = [1, 1]} : vector<96x16xf32> to vector<16x1xf32>
    %310 = vector.extract_strided_slice %14 {offsets = [64, 3], sizes = [16, 1], strides = [1, 1]} : vector<96x16xf32> to vector<16x1xf32>
    %311 = vector.extract_strided_slice %14 {offsets = [80, 3], sizes = [16, 1], strides = [1, 1]} : vector<96x16xf32> to vector<16x1xf32>
    %312 = vector.extract_strided_slice %14 {offsets = [32, 11], sizes = [16, 1], strides = [1, 1]} : vector<96x16xf32> to vector<16x1xf32>
    %313 = vector.extract_strided_slice %14 {offsets = [48, 11], sizes = [16, 1], strides = [1, 1]} : vector<96x16xf32> to vector<16x1xf32>
    %314 = vector.extract_strided_slice %14 {offsets = [64, 11], sizes = [16, 1], strides = [1, 1]} : vector<96x16xf32> to vector<16x1xf32>
    %315 = vector.extract_strided_slice %14 {offsets = [80, 11], sizes = [16, 1], strides = [1, 1]} : vector<96x16xf32> to vector<16x1xf32>
    %c96_i32_54 = arith.constant 96 : i32
    %316 = vector.broadcast %c96_i32_54 : i32 to vector<16x128xi32>
    %317 = arith.cmpi slt, %64, %316 : vector<16x128xi32>
    %318 = vector.shape_cast %306 : vector<16x1xf32> to vector<16x1xf32>
    %319 = vector.broadcast %318 : vector<16x1xf32> to vector<16x128xf32>
    %320 = vector.shape_cast %307 : vector<16x1xf32> to vector<16x1xf32>
    %321 = vector.broadcast %320 : vector<16x1xf32> to vector<16x128xf32>
    %322 = arith.select %317, %319, %321 : vector<16x128xi1>, vector<16x128xf32>
    %c64_i32_55 = arith.constant 64 : i32
    %323 = vector.broadcast %c64_i32_55 : i32 to vector<16x128xi32>
    %324 = arith.cmpi slt, %64, %323 : vector<16x128xi32>
    %325 = vector.shape_cast %305 : vector<16x1xf32> to vector<16x1xf32>
    %326 = vector.broadcast %325 : vector<16x1xf32> to vector<16x128xf32>
    %327 = arith.select %324, %326, %322 : vector<16x128xi1>, vector<16x128xf32>
    %c32_i32_56 = arith.constant 32 : i32
    %328 = vector.broadcast %c32_i32_56 : i32 to vector<16x128xi32>
    %329 = arith.cmpi slt, %64, %328 : vector<16x128xi32>
    %330 = vector.shape_cast %304 : vector<16x1xf32> to vector<16x1xf32>
    %331 = vector.broadcast %330 : vector<16x1xf32> to vector<16x128xf32>
    %332 = arith.select %329, %331, %327 : vector<16x128xi1>, vector<16x128xf32>
    %c112_i32_57 = arith.constant 112 : i32
    %333 = vector.broadcast %c112_i32_57 : i32 to vector<16x128xi32>
    %334 = arith.cmpi slt, %64, %333 : vector<16x128xi32>
    %335 = vector.shape_cast %314 : vector<16x1xf32> to vector<16x1xf32>
    %336 = vector.broadcast %335 : vector<16x1xf32> to vector<16x128xf32>
    %337 = vector.shape_cast %315 : vector<16x1xf32> to vector<16x1xf32>
    %338 = vector.broadcast %337 : vector<16x1xf32> to vector<16x128xf32>
    %339 = arith.select %334, %336, %338 : vector<16x128xi1>, vector<16x128xf32>
    %c96_i32_58 = arith.constant 96 : i32
    %340 = vector.broadcast %c96_i32_58 : i32 to vector<16x128xi32>
    %341 = arith.cmpi slt, %64, %340 : vector<16x128xi32>
    %342 = vector.shape_cast %313 : vector<16x1xf32> to vector<16x1xf32>
    %343 = vector.broadcast %342 : vector<16x1xf32> to vector<16x128xf32>
    %344 = arith.select %341, %343, %339 : vector<16x128xi1>, vector<16x128xf32>
    %c80_i32_59 = arith.constant 80 : i32
    %345 = vector.broadcast %c80_i32_59 : i32 to vector<16x128xi32>
    %346 = arith.cmpi slt, %64, %345 : vector<16x128xi32>
    %347 = vector.shape_cast %312 : vector<16x1xf32> to vector<16x1xf32>
    %348 = vector.broadcast %347 : vector<16x1xf32> to vector<16x128xf32>
    %349 = arith.select %346, %348, %344 : vector<16x128xi1>, vector<16x128xf32>
    %c64_i32_60 = arith.constant 64 : i32
    %350 = vector.broadcast %c64_i32_60 : i32 to vector<16x128xi32>
    %351 = arith.cmpi slt, %64, %350 : vector<16x128xi32>
    %352 = vector.shape_cast %311 : vector<16x1xf32> to vector<16x1xf32>
    %353 = vector.broadcast %352 : vector<16x1xf32> to vector<16x128xf32>
    %354 = arith.select %351, %353, %349 : vector<16x128xi1>, vector<16x128xf32>
    %c48_i32_61 = arith.constant 48 : i32
    %355 = vector.broadcast %c48_i32_61 : i32 to vector<16x128xi32>
    %356 = arith.cmpi slt, %64, %355 : vector<16x128xi32>
    %357 = vector.shape_cast %310 : vector<16x1xf32> to vector<16x1xf32>
    %358 = vector.broadcast %357 : vector<16x1xf32> to vector<16x128xf32>
    %359 = arith.select %356, %358, %354 : vector<16x128xi1>, vector<16x128xf32>
    %c32_i32_62 = arith.constant 32 : i32
    %360 = vector.broadcast %c32_i32_62 : i32 to vector<16x128xi32>
    %361 = arith.cmpi slt, %64, %360 : vector<16x128xi32>
    %362 = vector.shape_cast %309 : vector<16x1xf32> to vector<16x1xf32>
    %363 = vector.broadcast %362 : vector<16x1xf32> to vector<16x128xf32>
    %364 = arith.select %361, %363, %359 : vector<16x128xi1>, vector<16x128xf32>
    %c16_i32_63 = arith.constant 16 : i32
    %365 = vector.broadcast %c16_i32_63 : i32 to vector<16x128xi32>
    %366 = arith.cmpi slt, %64, %365 : vector<16x128xi32>
    %367 = vector.shape_cast %308 : vector<16x1xf32> to vector<16x1xf32>
    %368 = vector.broadcast %367 : vector<16x1xf32> to vector<16x128xf32>
    %369 = arith.select %366, %368, %364 : vector<16x128xi1>, vector<16x128xf32>
    %370 = arith.mulf %303, %296 : vector<16x128xf32>
    %371 = vector.extract_strided_slice %62 {offsets = [3, 0], sizes = [1, 128], strides = [1, 1]} : vector<8x128xf32> to vector<1x128xf32>
    %372 = vector.broadcast %371 : vector<1x128xf32> to vector<16x128xf32>
    %373 = arith.mulf %372, %332 : vector<16x128xf32>
    %374 = arith.addf %370, %373 : vector<16x128xf32>
    %375 = arith.mulf %374, %369 : vector<16x128xf32>
    %cst_64 = arith.constant dense<0.000000e+00> : vector<128xf32>
    %376 = vector.multi_reduction <add>, %375, %cst_64 [0] : vector<16x128xf32> to vector<128xf32>
    %377 = vector.shape_cast %376 : vector<128xf32> to vector<1x128xf32>
    %378 = vector.extract_strided_slice %61 {offsets = [4, 0], sizes = [1, 128], strides = [1, 1]} : vector<8x128xf32> to vector<1x128xf32>
    %379 = vector.broadcast %378 : vector<1x128xf32> to vector<16x128xf32>
    %380 = arith.mulf %379, %63 : vector<16x128xf32>
    %381 = math.exp %380 : vector<16x128xf32>
    %382 = vector.extract_strided_slice %14 {offsets = [0, 4], sizes = [16, 1], strides = [1, 1]} : vector<96x16xf32> to vector<16x1xf32>
    %383 = vector.extract_strided_slice %14 {offsets = [16, 4], sizes = [16, 1], strides = [1, 1]} : vector<96x16xf32> to vector<16x1xf32>
    %384 = vector.extract_strided_slice %14 {offsets = [0, 12], sizes = [16, 1], strides = [1, 1]} : vector<96x16xf32> to vector<16x1xf32>
    %385 = vector.extract_strided_slice %14 {offsets = [16, 12], sizes = [16, 1], strides = [1, 1]} : vector<96x16xf32> to vector<16x1xf32>
    %386 = vector.extract_strided_slice %14 {offsets = [32, 4], sizes = [16, 1], strides = [1, 1]} : vector<96x16xf32> to vector<16x1xf32>
    %387 = vector.extract_strided_slice %14 {offsets = [48, 4], sizes = [16, 1], strides = [1, 1]} : vector<96x16xf32> to vector<16x1xf32>
    %388 = vector.extract_strided_slice %14 {offsets = [64, 4], sizes = [16, 1], strides = [1, 1]} : vector<96x16xf32> to vector<16x1xf32>
    %389 = vector.extract_strided_slice %14 {offsets = [80, 4], sizes = [16, 1], strides = [1, 1]} : vector<96x16xf32> to vector<16x1xf32>
    %390 = vector.extract_strided_slice %14 {offsets = [32, 12], sizes = [16, 1], strides = [1, 1]} : vector<96x16xf32> to vector<16x1xf32>
    %391 = vector.extract_strided_slice %14 {offsets = [48, 12], sizes = [16, 1], strides = [1, 1]} : vector<96x16xf32> to vector<16x1xf32>
    %392 = vector.extract_strided_slice %14 {offsets = [64, 12], sizes = [16, 1], strides = [1, 1]} : vector<96x16xf32> to vector<16x1xf32>
    %393 = vector.extract_strided_slice %14 {offsets = [80, 12], sizes = [16, 1], strides = [1, 1]} : vector<96x16xf32> to vector<16x1xf32>
    %c96_i32_65 = arith.constant 96 : i32
    %394 = vector.broadcast %c96_i32_65 : i32 to vector<16x128xi32>
    %395 = arith.cmpi slt, %64, %394 : vector<16x128xi32>
    %396 = vector.shape_cast %384 : vector<16x1xf32> to vector<16x1xf32>
    %397 = vector.broadcast %396 : vector<16x1xf32> to vector<16x128xf32>
    %398 = vector.shape_cast %385 : vector<16x1xf32> to vector<16x1xf32>
    %399 = vector.broadcast %398 : vector<16x1xf32> to vector<16x128xf32>
    %400 = arith.select %395, %397, %399 : vector<16x128xi1>, vector<16x128xf32>
    %c64_i32_66 = arith.constant 64 : i32
    %401 = vector.broadcast %c64_i32_66 : i32 to vector<16x128xi32>
    %402 = arith.cmpi slt, %64, %401 : vector<16x128xi32>
    %403 = vector.shape_cast %383 : vector<16x1xf32> to vector<16x1xf32>
    %404 = vector.broadcast %403 : vector<16x1xf32> to vector<16x128xf32>
    %405 = arith.select %402, %404, %400 : vector<16x128xi1>, vector<16x128xf32>
    %c32_i32_67 = arith.constant 32 : i32
    %406 = vector.broadcast %c32_i32_67 : i32 to vector<16x128xi32>
    %407 = arith.cmpi slt, %64, %406 : vector<16x128xi32>
    %408 = vector.shape_cast %382 : vector<16x1xf32> to vector<16x1xf32>
    %409 = vector.broadcast %408 : vector<16x1xf32> to vector<16x128xf32>
    %410 = arith.select %407, %409, %405 : vector<16x128xi1>, vector<16x128xf32>
    %c112_i32_68 = arith.constant 112 : i32
    %411 = vector.broadcast %c112_i32_68 : i32 to vector<16x128xi32>
    %412 = arith.cmpi slt, %64, %411 : vector<16x128xi32>
    %413 = vector.shape_cast %392 : vector<16x1xf32> to vector<16x1xf32>
    %414 = vector.broadcast %413 : vector<16x1xf32> to vector<16x128xf32>
    %415 = vector.shape_cast %393 : vector<16x1xf32> to vector<16x1xf32>
    %416 = vector.broadcast %415 : vector<16x1xf32> to vector<16x128xf32>
    %417 = arith.select %412, %414, %416 : vector<16x128xi1>, vector<16x128xf32>
    %c96_i32_69 = arith.constant 96 : i32
    %418 = vector.broadcast %c96_i32_69 : i32 to vector<16x128xi32>
    %419 = arith.cmpi slt, %64, %418 : vector<16x128xi32>
    %420 = vector.shape_cast %391 : vector<16x1xf32> to vector<16x1xf32>
    %421 = vector.broadcast %420 : vector<16x1xf32> to vector<16x128xf32>
    %422 = arith.select %419, %421, %417 : vector<16x128xi1>, vector<16x128xf32>
    %c80_i32_70 = arith.constant 80 : i32
    %423 = vector.broadcast %c80_i32_70 : i32 to vector<16x128xi32>
    %424 = arith.cmpi slt, %64, %423 : vector<16x128xi32>
    %425 = vector.shape_cast %390 : vector<16x1xf32> to vector<16x1xf32>
    %426 = vector.broadcast %425 : vector<16x1xf32> to vector<16x128xf32>
    %427 = arith.select %424, %426, %422 : vector<16x128xi1>, vector<16x128xf32>
    %c64_i32_71 = arith.constant 64 : i32
    %428 = vector.broadcast %c64_i32_71 : i32 to vector<16x128xi32>
    %429 = arith.cmpi slt, %64, %428 : vector<16x128xi32>
    %430 = vector.shape_cast %389 : vector<16x1xf32> to vector<16x1xf32>
    %431 = vector.broadcast %430 : vector<16x1xf32> to vector<16x128xf32>
    %432 = arith.select %429, %431, %427 : vector<16x128xi1>, vector<16x128xf32>
    %c48_i32_72 = arith.constant 48 : i32
    %433 = vector.broadcast %c48_i32_72 : i32 to vector<16x128xi32>
    %434 = arith.cmpi slt, %64, %433 : vector<16x128xi32>
    %435 = vector.shape_cast %388 : vector<16x1xf32> to vector<16x1xf32>
    %436 = vector.broadcast %435 : vector<16x1xf32> to vector<16x128xf32>
    %437 = arith.select %434, %436, %432 : vector<16x128xi1>, vector<16x128xf32>
    %c32_i32_73 = arith.constant 32 : i32
    %438 = vector.broadcast %c32_i32_73 : i32 to vector<16x128xi32>
    %439 = arith.cmpi slt, %64, %438 : vector<16x128xi32>
    %440 = vector.shape_cast %387 : vector<16x1xf32> to vector<16x1xf32>
    %441 = vector.broadcast %440 : vector<16x1xf32> to vector<16x128xf32>
    %442 = arith.select %439, %441, %437 : vector<16x128xi1>, vector<16x128xf32>
    %c16_i32_74 = arith.constant 16 : i32
    %443 = vector.broadcast %c16_i32_74 : i32 to vector<16x128xi32>
    %444 = arith.cmpi slt, %64, %443 : vector<16x128xi32>
    %445 = vector.shape_cast %386 : vector<16x1xf32> to vector<16x1xf32>
    %446 = vector.broadcast %445 : vector<16x1xf32> to vector<16x128xf32>
    %447 = arith.select %444, %446, %442 : vector<16x128xi1>, vector<16x128xf32>
    %448 = arith.mulf %381, %374 : vector<16x128xf32>
    %449 = vector.extract_strided_slice %62 {offsets = [4, 0], sizes = [1, 128], strides = [1, 1]} : vector<8x128xf32> to vector<1x128xf32>
    %450 = vector.broadcast %449 : vector<1x128xf32> to vector<16x128xf32>
    %451 = arith.mulf %450, %410 : vector<16x128xf32>
    %452 = arith.addf %448, %451 : vector<16x128xf32>
    %453 = arith.mulf %452, %447 : vector<16x128xf32>
    %cst_75 = arith.constant dense<0.000000e+00> : vector<128xf32>
    %454 = vector.multi_reduction <add>, %453, %cst_75 [0] : vector<16x128xf32> to vector<128xf32>
    %455 = vector.shape_cast %454 : vector<128xf32> to vector<1x128xf32>
    %456 = vector.extract_strided_slice %61 {offsets = [5, 0], sizes = [1, 128], strides = [1, 1]} : vector<8x128xf32> to vector<1x128xf32>
    %457 = vector.broadcast %456 : vector<1x128xf32> to vector<16x128xf32>
    %458 = arith.mulf %457, %63 : vector<16x128xf32>
    %459 = math.exp %458 : vector<16x128xf32>
    %460 = vector.extract_strided_slice %14 {offsets = [0, 5], sizes = [16, 1], strides = [1, 1]} : vector<96x16xf32> to vector<16x1xf32>
    %461 = vector.extract_strided_slice %14 {offsets = [16, 5], sizes = [16, 1], strides = [1, 1]} : vector<96x16xf32> to vector<16x1xf32>
    %462 = vector.extract_strided_slice %14 {offsets = [0, 13], sizes = [16, 1], strides = [1, 1]} : vector<96x16xf32> to vector<16x1xf32>
    %463 = vector.extract_strided_slice %14 {offsets = [16, 13], sizes = [16, 1], strides = [1, 1]} : vector<96x16xf32> to vector<16x1xf32>
    %464 = vector.extract_strided_slice %14 {offsets = [32, 5], sizes = [16, 1], strides = [1, 1]} : vector<96x16xf32> to vector<16x1xf32>
    %465 = vector.extract_strided_slice %14 {offsets = [48, 5], sizes = [16, 1], strides = [1, 1]} : vector<96x16xf32> to vector<16x1xf32>
    %466 = vector.extract_strided_slice %14 {offsets = [64, 5], sizes = [16, 1], strides = [1, 1]} : vector<96x16xf32> to vector<16x1xf32>
    %467 = vector.extract_strided_slice %14 {offsets = [80, 5], sizes = [16, 1], strides = [1, 1]} : vector<96x16xf32> to vector<16x1xf32>
    %468 = vector.extract_strided_slice %14 {offsets = [32, 13], sizes = [16, 1], strides = [1, 1]} : vector<96x16xf32> to vector<16x1xf32>
    %469 = vector.extract_strided_slice %14 {offsets = [48, 13], sizes = [16, 1], strides = [1, 1]} : vector<96x16xf32> to vector<16x1xf32>
    %470 = vector.extract_strided_slice %14 {offsets = [64, 13], sizes = [16, 1], strides = [1, 1]} : vector<96x16xf32> to vector<16x1xf32>
    %471 = vector.extract_strided_slice %14 {offsets = [80, 13], sizes = [16, 1], strides = [1, 1]} : vector<96x16xf32> to vector<16x1xf32>
    %c96_i32_76 = arith.constant 96 : i32
    %472 = vector.broadcast %c96_i32_76 : i32 to vector<16x128xi32>
    %473 = arith.cmpi slt, %64, %472 : vector<16x128xi32>
    %474 = vector.shape_cast %462 : vector<16x1xf32> to vector<16x1xf32>
    %475 = vector.broadcast %474 : vector<16x1xf32> to vector<16x128xf32>
    %476 = vector.shape_cast %463 : vector<16x1xf32> to vector<16x1xf32>
    %477 = vector.broadcast %476 : vector<16x1xf32> to vector<16x128xf32>
    %478 = arith.select %473, %475, %477 : vector<16x128xi1>, vector<16x128xf32>
    %c64_i32_77 = arith.constant 64 : i32
    %479 = vector.broadcast %c64_i32_77 : i32 to vector<16x128xi32>
    %480 = arith.cmpi slt, %64, %479 : vector<16x128xi32>
    %481 = vector.shape_cast %461 : vector<16x1xf32> to vector<16x1xf32>
    %482 = vector.broadcast %481 : vector<16x1xf32> to vector<16x128xf32>
    %483 = arith.select %480, %482, %478 : vector<16x128xi1>, vector<16x128xf32>
    %c32_i32_78 = arith.constant 32 : i32
    %484 = vector.broadcast %c32_i32_78 : i32 to vector<16x128xi32>
    %485 = arith.cmpi slt, %64, %484 : vector<16x128xi32>
    %486 = vector.shape_cast %460 : vector<16x1xf32> to vector<16x1xf32>
    %487 = vector.broadcast %486 : vector<16x1xf32> to vector<16x128xf32>
    %488 = arith.select %485, %487, %483 : vector<16x128xi1>, vector<16x128xf32>
    %c112_i32_79 = arith.constant 112 : i32
    %489 = vector.broadcast %c112_i32_79 : i32 to vector<16x128xi32>
    %490 = arith.cmpi slt, %64, %489 : vector<16x128xi32>
    %491 = vector.shape_cast %470 : vector<16x1xf32> to vector<16x1xf32>
    %492 = vector.broadcast %491 : vector<16x1xf32> to vector<16x128xf32>
    %493 = vector.shape_cast %471 : vector<16x1xf32> to vector<16x1xf32>
    %494 = vector.broadcast %493 : vector<16x1xf32> to vector<16x128xf32>
    %495 = arith.select %490, %492, %494 : vector<16x128xi1>, vector<16x128xf32>
    %c96_i32_80 = arith.constant 96 : i32
    %496 = vector.broadcast %c96_i32_80 : i32 to vector<16x128xi32>
    %497 = arith.cmpi slt, %64, %496 : vector<16x128xi32>
    %498 = vector.shape_cast %469 : vector<16x1xf32> to vector<16x1xf32>
    %499 = vector.broadcast %498 : vector<16x1xf32> to vector<16x128xf32>
    %500 = arith.select %497, %499, %495 : vector<16x128xi1>, vector<16x128xf32>
    %c80_i32_81 = arith.constant 80 : i32
    %501 = vector.broadcast %c80_i32_81 : i32 to vector<16x128xi32>
    %502 = arith.cmpi slt, %64, %501 : vector<16x128xi32>
    %503 = vector.shape_cast %468 : vector<16x1xf32> to vector<16x1xf32>
    %504 = vector.broadcast %503 : vector<16x1xf32> to vector<16x128xf32>
    %505 = arith.select %502, %504, %500 : vector<16x128xi1>, vector<16x128xf32>
    %c64_i32_82 = arith.constant 64 : i32
    %506 = vector.broadcast %c64_i32_82 : i32 to vector<16x128xi32>
    %507 = arith.cmpi slt, %64, %506 : vector<16x128xi32>
    %508 = vector.shape_cast %467 : vector<16x1xf32> to vector<16x1xf32>
    %509 = vector.broadcast %508 : vector<16x1xf32> to vector<16x128xf32>
    %510 = arith.select %507, %509, %505 : vector<16x128xi1>, vector<16x128xf32>
    %c48_i32_83 = arith.constant 48 : i32
    %511 = vector.broadcast %c48_i32_83 : i32 to vector<16x128xi32>
    %512 = arith.cmpi slt, %64, %511 : vector<16x128xi32>
    %513 = vector.shape_cast %466 : vector<16x1xf32> to vector<16x1xf32>
    %514 = vector.broadcast %513 : vector<16x1xf32> to vector<16x128xf32>
    %515 = arith.select %512, %514, %510 : vector<16x128xi1>, vector<16x128xf32>
    %c32_i32_84 = arith.constant 32 : i32
    %516 = vector.broadcast %c32_i32_84 : i32 to vector<16x128xi32>
    %517 = arith.cmpi slt, %64, %516 : vector<16x128xi32>
    %518 = vector.shape_cast %465 : vector<16x1xf32> to vector<16x1xf32>
    %519 = vector.broadcast %518 : vector<16x1xf32> to vector<16x128xf32>
    %520 = arith.select %517, %519, %515 : vector<16x128xi1>, vector<16x128xf32>
    %c16_i32_85 = arith.constant 16 : i32
    %521 = vector.broadcast %c16_i32_85 : i32 to vector<16x128xi32>
    %522 = arith.cmpi slt, %64, %521 : vector<16x128xi32>
    %523 = vector.shape_cast %464 : vector<16x1xf32> to vector<16x1xf32>
    %524 = vector.broadcast %523 : vector<16x1xf32> to vector<16x128xf32>
    %525 = arith.select %522, %524, %520 : vector<16x128xi1>, vector<16x128xf32>
    %526 = arith.mulf %459, %452 : vector<16x128xf32>
    %527 = vector.extract_strided_slice %62 {offsets = [5, 0], sizes = [1, 128], strides = [1, 1]} : vector<8x128xf32> to vector<1x128xf32>
    %528 = vector.broadcast %527 : vector<1x128xf32> to vector<16x128xf32>
    %529 = arith.mulf %528, %488 : vector<16x128xf32>
    %530 = arith.addf %526, %529 : vector<16x128xf32>
    %531 = arith.mulf %530, %525 : vector<16x128xf32>
    %cst_86 = arith.constant dense<0.000000e+00> : vector<128xf32>
    %532 = vector.multi_reduction <add>, %531, %cst_86 [0] : vector<16x128xf32> to vector<128xf32>
    %533 = vector.shape_cast %532 : vector<128xf32> to vector<1x128xf32>
    %534 = vector.extract_strided_slice %61 {offsets = [6, 0], sizes = [1, 128], strides = [1, 1]} : vector<8x128xf32> to vector<1x128xf32>
    %535 = vector.broadcast %534 : vector<1x128xf32> to vector<16x128xf32>
    %536 = arith.mulf %535, %63 : vector<16x128xf32>
    %537 = math.exp %536 : vector<16x128xf32>
    %538 = vector.extract_strided_slice %14 {offsets = [0, 6], sizes = [16, 1], strides = [1, 1]} : vector<96x16xf32> to vector<16x1xf32>
    %539 = vector.extract_strided_slice %14 {offsets = [16, 6], sizes = [16, 1], strides = [1, 1]} : vector<96x16xf32> to vector<16x1xf32>
    %540 = vector.extract_strided_slice %14 {offsets = [0, 14], sizes = [16, 1], strides = [1, 1]} : vector<96x16xf32> to vector<16x1xf32>
    %541 = vector.extract_strided_slice %14 {offsets = [16, 14], sizes = [16, 1], strides = [1, 1]} : vector<96x16xf32> to vector<16x1xf32>
    %542 = vector.extract_strided_slice %14 {offsets = [32, 6], sizes = [16, 1], strides = [1, 1]} : vector<96x16xf32> to vector<16x1xf32>
    %543 = vector.extract_strided_slice %14 {offsets = [48, 6], sizes = [16, 1], strides = [1, 1]} : vector<96x16xf32> to vector<16x1xf32>
    %544 = vector.extract_strided_slice %14 {offsets = [64, 6], sizes = [16, 1], strides = [1, 1]} : vector<96x16xf32> to vector<16x1xf32>
    %545 = vector.extract_strided_slice %14 {offsets = [80, 6], sizes = [16, 1], strides = [1, 1]} : vector<96x16xf32> to vector<16x1xf32>
    %546 = vector.extract_strided_slice %14 {offsets = [32, 14], sizes = [16, 1], strides = [1, 1]} : vector<96x16xf32> to vector<16x1xf32>
    %547 = vector.extract_strided_slice %14 {offsets = [48, 14], sizes = [16, 1], strides = [1, 1]} : vector<96x16xf32> to vector<16x1xf32>
    %548 = vector.extract_strided_slice %14 {offsets = [64, 14], sizes = [16, 1], strides = [1, 1]} : vector<96x16xf32> to vector<16x1xf32>
    %549 = vector.extract_strided_slice %14 {offsets = [80, 14], sizes = [16, 1], strides = [1, 1]} : vector<96x16xf32> to vector<16x1xf32>
    %c96_i32_87 = arith.constant 96 : i32
    %550 = vector.broadcast %c96_i32_87 : i32 to vector<16x128xi32>
    %551 = arith.cmpi slt, %64, %550 : vector<16x128xi32>
    %552 = vector.shape_cast %540 : vector<16x1xf32> to vector<16x1xf32>
    %553 = vector.broadcast %552 : vector<16x1xf32> to vector<16x128xf32>
    %554 = vector.shape_cast %541 : vector<16x1xf32> to vector<16x1xf32>
    %555 = vector.broadcast %554 : vector<16x1xf32> to vector<16x128xf32>
    %556 = arith.select %551, %553, %555 : vector<16x128xi1>, vector<16x128xf32>
    %c64_i32_88 = arith.constant 64 : i32
    %557 = vector.broadcast %c64_i32_88 : i32 to vector<16x128xi32>
    %558 = arith.cmpi slt, %64, %557 : vector<16x128xi32>
    %559 = vector.shape_cast %539 : vector<16x1xf32> to vector<16x1xf32>
    %560 = vector.broadcast %559 : vector<16x1xf32> to vector<16x128xf32>
    %561 = arith.select %558, %560, %556 : vector<16x128xi1>, vector<16x128xf32>
    %c32_i32_89 = arith.constant 32 : i32
    %562 = vector.broadcast %c32_i32_89 : i32 to vector<16x128xi32>
    %563 = arith.cmpi slt, %64, %562 : vector<16x128xi32>
    %564 = vector.shape_cast %538 : vector<16x1xf32> to vector<16x1xf32>
    %565 = vector.broadcast %564 : vector<16x1xf32> to vector<16x128xf32>
    %566 = arith.select %563, %565, %561 : vector<16x128xi1>, vector<16x128xf32>
    %c112_i32_90 = arith.constant 112 : i32
    %567 = vector.broadcast %c112_i32_90 : i32 to vector<16x128xi32>
    %568 = arith.cmpi slt, %64, %567 : vector<16x128xi32>
    %569 = vector.shape_cast %548 : vector<16x1xf32> to vector<16x1xf32>
    %570 = vector.broadcast %569 : vector<16x1xf32> to vector<16x128xf32>
    %571 = vector.shape_cast %549 : vector<16x1xf32> to vector<16x1xf32>
    %572 = vector.broadcast %571 : vector<16x1xf32> to vector<16x128xf32>
    %573 = arith.select %568, %570, %572 : vector<16x128xi1>, vector<16x128xf32>
    %c96_i32_91 = arith.constant 96 : i32
    %574 = vector.broadcast %c96_i32_91 : i32 to vector<16x128xi32>
    %575 = arith.cmpi slt, %64, %574 : vector<16x128xi32>
    %576 = vector.shape_cast %547 : vector<16x1xf32> to vector<16x1xf32>
    %577 = vector.broadcast %576 : vector<16x1xf32> to vector<16x128xf32>
    %578 = arith.select %575, %577, %573 : vector<16x128xi1>, vector<16x128xf32>
    %c80_i32_92 = arith.constant 80 : i32
    %579 = vector.broadcast %c80_i32_92 : i32 to vector<16x128xi32>
    %580 = arith.cmpi slt, %64, %579 : vector<16x128xi32>
    %581 = vector.shape_cast %546 : vector<16x1xf32> to vector<16x1xf32>
    %582 = vector.broadcast %581 : vector<16x1xf32> to vector<16x128xf32>
    %583 = arith.select %580, %582, %578 : vector<16x128xi1>, vector<16x128xf32>
    %c64_i32_93 = arith.constant 64 : i32
    %584 = vector.broadcast %c64_i32_93 : i32 to vector<16x128xi32>
    %585 = arith.cmpi slt, %64, %584 : vector<16x128xi32>
    %586 = vector.shape_cast %545 : vector<16x1xf32> to vector<16x1xf32>
    %587 = vector.broadcast %586 : vector<16x1xf32> to vector<16x128xf32>
    %588 = arith.select %585, %587, %583 : vector<16x128xi1>, vector<16x128xf32>
    %c48_i32_94 = arith.constant 48 : i32
    %589 = vector.broadcast %c48_i32_94 : i32 to vector<16x128xi32>
    %590 = arith.cmpi slt, %64, %589 : vector<16x128xi32>
    %591 = vector.shape_cast %544 : vector<16x1xf32> to vector<16x1xf32>
    %592 = vector.broadcast %591 : vector<16x1xf32> to vector<16x128xf32>
    %593 = arith.select %590, %592, %588 : vector<16x128xi1>, vector<16x128xf32>
    %c32_i32_95 = arith.constant 32 : i32
    %594 = vector.broadcast %c32_i32_95 : i32 to vector<16x128xi32>
    %595 = arith.cmpi slt, %64, %594 : vector<16x128xi32>
    %596 = vector.shape_cast %543 : vector<16x1xf32> to vector<16x1xf32>
    %597 = vector.broadcast %596 : vector<16x1xf32> to vector<16x128xf32>
    %598 = arith.select %595, %597, %593 : vector<16x128xi1>, vector<16x128xf32>
    %c16_i32_96 = arith.constant 16 : i32
    %599 = vector.broadcast %c16_i32_96 : i32 to vector<16x128xi32>
    %600 = arith.cmpi slt, %64, %599 : vector<16x128xi32>
    %601 = vector.shape_cast %542 : vector<16x1xf32> to vector<16x1xf32>
    %602 = vector.broadcast %601 : vector<16x1xf32> to vector<16x128xf32>
    %603 = arith.select %600, %602, %598 : vector<16x128xi1>, vector<16x128xf32>
    %604 = arith.mulf %537, %530 : vector<16x128xf32>
    %605 = vector.extract_strided_slice %62 {offsets = [6, 0], sizes = [1, 128], strides = [1, 1]} : vector<8x128xf32> to vector<1x128xf32>
    %606 = vector.broadcast %605 : vector<1x128xf32> to vector<16x128xf32>
    %607 = arith.mulf %606, %566 : vector<16x128xf32>
    %608 = arith.addf %604, %607 : vector<16x128xf32>
    %609 = arith.mulf %608, %603 : vector<16x128xf32>
    %cst_97 = arith.constant dense<0.000000e+00> : vector<128xf32>
    %610 = vector.multi_reduction <add>, %609, %cst_97 [0] : vector<16x128xf32> to vector<128xf32>
    %611 = vector.shape_cast %610 : vector<128xf32> to vector<1x128xf32>
    %612 = vector.extract_strided_slice %61 {offsets = [7, 0], sizes = [1, 128], strides = [1, 1]} : vector<8x128xf32> to vector<1x128xf32>
    %613 = vector.broadcast %612 : vector<1x128xf32> to vector<16x128xf32>
    %614 = arith.mulf %613, %63 : vector<16x128xf32>
    %615 = math.exp %614 : vector<16x128xf32>
    %616 = vector.extract_strided_slice %14 {offsets = [0, 7], sizes = [16, 1], strides = [1, 1]} : vector<96x16xf32> to vector<16x1xf32>
    %617 = vector.extract_strided_slice %14 {offsets = [16, 7], sizes = [16, 1], strides = [1, 1]} : vector<96x16xf32> to vector<16x1xf32>
    %618 = vector.extract_strided_slice %14 {offsets = [0, 15], sizes = [16, 1], strides = [1, 1]} : vector<96x16xf32> to vector<16x1xf32>
    %619 = vector.extract_strided_slice %14 {offsets = [16, 15], sizes = [16, 1], strides = [1, 1]} : vector<96x16xf32> to vector<16x1xf32>
    %620 = vector.extract_strided_slice %14 {offsets = [32, 7], sizes = [16, 1], strides = [1, 1]} : vector<96x16xf32> to vector<16x1xf32>
    %621 = vector.extract_strided_slice %14 {offsets = [48, 7], sizes = [16, 1], strides = [1, 1]} : vector<96x16xf32> to vector<16x1xf32>
    %622 = vector.extract_strided_slice %14 {offsets = [64, 7], sizes = [16, 1], strides = [1, 1]} : vector<96x16xf32> to vector<16x1xf32>
    %623 = vector.extract_strided_slice %14 {offsets = [80, 7], sizes = [16, 1], strides = [1, 1]} : vector<96x16xf32> to vector<16x1xf32>
    %624 = vector.extract_strided_slice %14 {offsets = [32, 15], sizes = [16, 1], strides = [1, 1]} : vector<96x16xf32> to vector<16x1xf32>
    %625 = vector.extract_strided_slice %14 {offsets = [48, 15], sizes = [16, 1], strides = [1, 1]} : vector<96x16xf32> to vector<16x1xf32>
    %626 = vector.extract_strided_slice %14 {offsets = [64, 15], sizes = [16, 1], strides = [1, 1]} : vector<96x16xf32> to vector<16x1xf32>
    %627 = vector.extract_strided_slice %14 {offsets = [80, 15], sizes = [16, 1], strides = [1, 1]} : vector<96x16xf32> to vector<16x1xf32>
    %c96_i32_98 = arith.constant 96 : i32
    %628 = vector.broadcast %c96_i32_98 : i32 to vector<16x128xi32>
    %629 = arith.cmpi slt, %64, %628 : vector<16x128xi32>
    %630 = vector.shape_cast %618 : vector<16x1xf32> to vector<16x1xf32>
    %631 = vector.broadcast %630 : vector<16x1xf32> to vector<16x128xf32>
    %632 = vector.shape_cast %619 : vector<16x1xf32> to vector<16x1xf32>
    %633 = vector.broadcast %632 : vector<16x1xf32> to vector<16x128xf32>
    %634 = arith.select %629, %631, %633 : vector<16x128xi1>, vector<16x128xf32>
    %c64_i32_99 = arith.constant 64 : i32
    %635 = vector.broadcast %c64_i32_99 : i32 to vector<16x128xi32>
    %636 = arith.cmpi slt, %64, %635 : vector<16x128xi32>
    %637 = vector.shape_cast %617 : vector<16x1xf32> to vector<16x1xf32>
    %638 = vector.broadcast %637 : vector<16x1xf32> to vector<16x128xf32>
    %639 = arith.select %636, %638, %634 : vector<16x128xi1>, vector<16x128xf32>
    %c32_i32_100 = arith.constant 32 : i32
    %640 = vector.broadcast %c32_i32_100 : i32 to vector<16x128xi32>
    %641 = arith.cmpi slt, %64, %640 : vector<16x128xi32>
    %642 = vector.shape_cast %616 : vector<16x1xf32> to vector<16x1xf32>
    %643 = vector.broadcast %642 : vector<16x1xf32> to vector<16x128xf32>
    %644 = arith.select %641, %643, %639 : vector<16x128xi1>, vector<16x128xf32>
    %c112_i32_101 = arith.constant 112 : i32
    %645 = vector.broadcast %c112_i32_101 : i32 to vector<16x128xi32>
    %646 = arith.cmpi slt, %64, %645 : vector<16x128xi32>
    %647 = vector.shape_cast %626 : vector<16x1xf32> to vector<16x1xf32>
    %648 = vector.broadcast %647 : vector<16x1xf32> to vector<16x128xf32>
    %649 = vector.shape_cast %627 : vector<16x1xf32> to vector<16x1xf32>
    %650 = vector.broadcast %649 : vector<16x1xf32> to vector<16x128xf32>
    %651 = arith.select %646, %648, %650 : vector<16x128xi1>, vector<16x128xf32>
    %c96_i32_102 = arith.constant 96 : i32
    %652 = vector.broadcast %c96_i32_102 : i32 to vector<16x128xi32>
    %653 = arith.cmpi slt, %64, %652 : vector<16x128xi32>
    %654 = vector.shape_cast %625 : vector<16x1xf32> to vector<16x1xf32>
    %655 = vector.broadcast %654 : vector<16x1xf32> to vector<16x128xf32>
    %656 = arith.select %653, %655, %651 : vector<16x128xi1>, vector<16x128xf32>
    %c80_i32_103 = arith.constant 80 : i32
    %657 = vector.broadcast %c80_i32_103 : i32 to vector<16x128xi32>
    %658 = arith.cmpi slt, %64, %657 : vector<16x128xi32>
    %659 = vector.shape_cast %624 : vector<16x1xf32> to vector<16x1xf32>
    %660 = vector.broadcast %659 : vector<16x1xf32> to vector<16x128xf32>
    %661 = arith.select %658, %660, %656 : vector<16x128xi1>, vector<16x128xf32>
    %c64_i32_104 = arith.constant 64 : i32
    %662 = vector.broadcast %c64_i32_104 : i32 to vector<16x128xi32>
    %663 = arith.cmpi slt, %64, %662 : vector<16x128xi32>
    %664 = vector.shape_cast %623 : vector<16x1xf32> to vector<16x1xf32>
    %665 = vector.broadcast %664 : vector<16x1xf32> to vector<16x128xf32>
    %666 = arith.select %663, %665, %661 : vector<16x128xi1>, vector<16x128xf32>
    %c48_i32_105 = arith.constant 48 : i32
    %667 = vector.broadcast %c48_i32_105 : i32 to vector<16x128xi32>
    %668 = arith.cmpi slt, %64, %667 : vector<16x128xi32>
    %669 = vector.shape_cast %622 : vector<16x1xf32> to vector<16x1xf32>
    %670 = vector.broadcast %669 : vector<16x1xf32> to vector<16x128xf32>
    %671 = arith.select %668, %670, %666 : vector<16x128xi1>, vector<16x128xf32>
    %c32_i32_106 = arith.constant 32 : i32
    %672 = vector.broadcast %c32_i32_106 : i32 to vector<16x128xi32>
    %673 = arith.cmpi slt, %64, %672 : vector<16x128xi32>
    %674 = vector.shape_cast %621 : vector<16x1xf32> to vector<16x1xf32>
    %675 = vector.broadcast %674 : vector<16x1xf32> to vector<16x128xf32>
    %676 = arith.select %673, %675, %671 : vector<16x128xi1>, vector<16x128xf32>
    %c16_i32_107 = arith.constant 16 : i32
    %677 = vector.broadcast %c16_i32_107 : i32 to vector<16x128xi32>
    %678 = arith.cmpi slt, %64, %677 : vector<16x128xi32>
    %679 = vector.shape_cast %620 : vector<16x1xf32> to vector<16x1xf32>
    %680 = vector.broadcast %679 : vector<16x1xf32> to vector<16x128xf32>
    %681 = arith.select %678, %680, %676 : vector<16x128xi1>, vector<16x128xf32>
    %682 = arith.mulf %615, %608 : vector<16x128xf32>
    %683 = vector.extract_strided_slice %62 {offsets = [7, 0], sizes = [1, 128], strides = [1, 1]} : vector<8x128xf32> to vector<1x128xf32>
    %684 = vector.broadcast %683 : vector<1x128xf32> to vector<16x128xf32>
    %685 = arith.mulf %684, %644 : vector<16x128xf32>
    %686 = arith.addf %682, %685 : vector<16x128xf32>
    %687 = arith.mulf %686, %681 : vector<16x128xf32>
    %cst_108 = arith.constant dense<0.000000e+00> : vector<128xf32>
    %688 = vector.multi_reduction <add>, %687, %cst_108 [0] : vector<16x128xf32> to vector<128xf32>
    %689 = vector.shape_cast %688 : vector<128xf32> to vector<1x128xf32>
    %690 = tpu.concatenate %143, %221, %299, %377, %455, %533, %611, %689 in 0 : vector<1x128xf32>, vector<1x128xf32>, vector<1x128xf32>, vector<1x128xf32>, vector<1x128xf32>, vector<1x128xf32>, vector<1x128xf32>, vector<1x128xf32> -> vector<8x128xf32>
    %c0_109 = arith.constant 0 : index
    %c0_110 = arith.constant 0 : index
    %691 = vector.load %arg8[%c0_109, %c0_110] : memref<1x128xf32, #tpu.memory_space<vmem>>, vector<1x128xf32>
    %692 = vector.broadcast %691 : vector<1x128xf32> to vector<8x128xf32>
    %693 = arith.mulf %692, %49 : vector<8x128xf32>
    %694 = arith.addf %690, %693 : vector<8x128xf32>
    %cst_111 = arith.constant 0.000000e+00 : f32
    %695 = vector.broadcast %cst_111 : f32 to vector<8x128xf32>
    %696 = arith.subf %695, %6 : vector<8x128xf32>
    %697 = math.exp %696 : vector<8x128xf32>
    %cst_112 = arith.constant 1.000000e+00 : f32
    %698 = vector.broadcast %cst_112 : f32 to vector<8x128xf32>
    %699 = arith.addf %698, %697 : vector<8x128xf32>
    %cst_113 = arith.constant 1.000000e+00 : f32
    %700 = vector.broadcast %cst_113 : f32 to vector<8x128xf32>
    %701 = arith.divf %700, %699 : vector<8x128xf32>
    %702 = arith.mulf %6, %701 : vector<8x128xf32>
    %703 = arith.mulf %694, %702 : vector<8x128xf32>
    %c0_114 = arith.constant 0 : index
    %c0_115 = arith.constant 0 : index
    %704 = vector.load %arg9[%c0_114, %c0_115] : memref<128x64xf32, #tpu.memory_space<vmem>>, vector<128x64xf32>
    %cst_116 = arith.constant dense<0.000000e+00> : vector<8x64xf32>
    %705 = tpu.matmul %703, %704, %cst_116 {dimension_numbers = #tpu.dot_dimension_numbers<[1], [0], [0], [1], [0, 0, 1, 1], [], []>} : vector<8x128xf32>, vector<128x64xf32>, vector<8x64xf32> -> vector<8x64xf32>
    %706 = vector.extract_strided_slice %705 {offsets = [0, 0], sizes = [8, 32], strides = [1, 1]} : vector<8x64xf32> to vector<8x32xf32>
    %c0_117 = arith.constant 0 : index
    %c0_118 = arith.constant 0 : index
    %c0_119 = arith.constant 0 : index
    %707 = vector.load %arg10[%c0_117, %c0_118, %c0_119] : memref<2x8x32xf32, #tpu.memory_space<vmem>>, vector<1x8x32xf32>
    %708 = vector.shape_cast %707 : vector<1x8x32xf32> to vector<8x32xf32>
    %709 = vector.shape_cast %706 : vector<8x32xf32> to vector<1x8x32xf32>
    tpu.vector_store %arg10[%c0_117, %c0_118, %c0_119], %709 {strides = array<i32>} : memref<2x8x32xf32, #tpu.memory_space<vmem>>, vector<1x8x32xf32>,
    %710 = vector.extract_strided_slice %705 {offsets = [0, 32], sizes = [8, 32], strides = [1, 1]} : vector<8x64xf32> to vector<8x32xf32>
    %c1_120 = arith.constant 1 : index
    %c0_121 = arith.constant 0 : index
    %c0_122 = arith.constant 0 : index
    %711 = vector.load %arg10[%c1_120, %c0_121, %c0_122] : memref<2x8x32xf32, #tpu.memory_space<vmem>>, vector<1x8x32xf32>
    %712 = vector.shape_cast %711 : vector<1x8x32xf32> to vector<8x32xf32>
    %713 = vector.shape_cast %710 : vector<8x32xf32> to vector<1x8x32xf32>
    tpu.vector_store %arg10[%c1_120, %c0_121, %c0_122], %713 {strides = array<i32>} : memref<2x8x32xf32, #tpu.memory_space<vmem>>, vector<1x8x32xf32>,
    return
  }
  func.func @transform_0(%arg0: i32) -> (i32, i32, i32) {
    %c0_i32 = arith.constant 0 : i32
    %c0_i32_0 = arith.constant 0 : i32
    %c0_i32_1 = arith.constant 0 : i32
    return %arg0, %c0_i32, %c0_i32_0 : i32, i32, i32
  }
  func.func @transform_1(%arg0: i32) -> (i32, i32) {
    %c0_i32 = arith.constant 0 : i32
    %c0_i32_0 = arith.constant 0 : i32
    %c0_i32_1 = arith.constant 0 : i32
    return %c0_i32, %c0_i32_0 : i32, i32
  }
  func.func @transform_2(%arg0: i32) -> (i32, i32) {
    %c0_i32 = arith.constant 0 : i32
    %c0_i32_0 = arith.constant 0 : i32
    %c0_i32_1 = arith.constant 0 : i32
    return %c0_i32, %c0_i32_0 : i32, i32
  }
  func.func @transform_3(%arg0: i32) -> (i32, i32) {
    %c0_i32 = arith.constant 0 : i32
    %c0_i32_0 = arith.constant 0 : i32
    %c0_i32_1 = arith.constant 0 : i32
    return %c0_i32, %c0_i32_0 : i32, i32
  }
  func.func @transform_4(%arg0: i32) -> (i32, i32) {
    %c0_i32 = arith.constant 0 : i32
    %c0_i32_0 = arith.constant 0 : i32
    %c0_i32_1 = arith.constant 0 : i32
    return %c0_i32, %c0_i32_0 : i32, i32
  }
  func.func @transform_5(%arg0: i32) -> (i32, i32) {
    %c0_i32 = arith.constant 0 : i32
    %c0_i32_0 = arith.constant 0 : i32
    %c0_i32_1 = arith.constant 0 : i32
    return %c0_i32, %c0_i32_0 : i32, i32
  }
  func.func @transform_6(%arg0: i32) -> (i32, i32) {
    %c0_i32 = arith.constant 0 : i32
    %c0_i32_0 = arith.constant 0 : i32
    %c0_i32_1 = arith.constant 0 : i32
    return %c0_i32, %c0_i32_0 : i32, i32
  }
  func.func @transform_7(%arg0: i32) -> (i32, i32) {
    %c0_i32 = arith.constant 0 : i32
    %c0_i32_0 = arith.constant 0 : i32
    %c0_i32_1 = arith.constant 0 : i32
    return %c0_i32, %c0_i32_0 : i32, i32
  }
  func.func @transform_8(%arg0: i32) -> (i32, i32) {
    %c0_i32 = arith.constant 0 : i32
    %c0_i32_0 = arith.constant 0 : i32
    %c0_i32_1 = arith.constant 0 : i32
    return %c0_i32, %c0_i32_0 : i32, i32
  }
  func.func @transform_9(%arg0: i32) -> (i32, i32, i32) {
    %c0_i32 = arith.constant 0 : i32
    %c0_i32_0 = arith.constant 0 : i32
    %c0_i32_1 = arith.constant 0 : i32
    return %arg0, %c0_i32, %c0_i32_0 : i32, i32, i32
  }
}

</mosaic_0001>

<llo_original>
// kernel: mamba_forward.1
$region0: #{mamba_forward.1}
  #allocation0 [shape = 'u32[]', space=smem, size = 0x4, offset = 0x4, fixed_abs, tag = 'smem constant byte address 0x4 - core index']
  #allocation1 [shape = 'u32[72,128]{1,0:T(1,128)}', space=vmem, size = 0x9000, scoped, tag = 'internal scratch']
  %s0 = inlined_call_operand.vmem [shape: f32[2,8,32], index: 0, kind: input, shape index: {}]
  %s1 = inlined_call_operand.vmem [shape: f32[32,192], index: 1, kind: input, shape index: {}]
  %s2 = inlined_call_operand.vmem [shape: f32[96,32], index: 2, kind: input, shape index: {}]
  %s3 = inlined_call_operand.vmem [shape: f32[1,128], index: 3, kind: input, shape index: {}]
  %s4 = inlined_call_operand.vmem [shape: f32[4,128], index: 4, kind: input, shape index: {}]
  %s5 = inlined_call_operand.vmem [shape: f32[1,128], index: 5, kind: input, shape index: {}]
  %s6 = inlined_call_operand.vmem [shape: f32[16,128], index: 6, kind: input, shape index: {}]
  %s7 = inlined_call_operand.vmem [shape: f32[1,128], index: 7, kind: input, shape index: {}]
  %s8 = inlined_call_operand.vmem [shape: f32[128,64], index: 8, kind: input, shape index: {}]
  %s9 = inlined_call_operand.hbm [shape: f32[2,8,32], index: 9, kind: output, shape index: {}]
  %s10 = sld [smem:[#allocation0]]
  $region46: #{mamba_forward.1} parent=0
    _
  %s12 = ssub.s32 1, %s10
  %s13 = scalar_select 0, %s12, %s10
  $region1: #{mamba_forward.1} parent=0
    #allocation2 [shape = 'u8[8192]{0}', space=vmem, size = 0x2000, scoped, tag = 'output window, operand 0, single buffered']
    #allocation3 [shape = 's32[1]{0}', space=sflag, size = 0x4, scoped, tag = 'scoped memory for mamba_forward.1']
    %14 = vsyncpa [#allocation3], 0
    // Predicated region
    $region2: #{mamba_forward.1} parent=1 // pred_check
      _
    $region3: #{mamba_forward.1} parent=1 // pred_check_branch
      %16 = sbr.rel (0) target = $region5
    $region4: #{mamba_forward.1} parent=1 // pred_region
      _
    $region5: #{mamba_forward.1} parent=1 // pred_fallthru
      _
    // Predicated region
    $region6: #{mamba_forward.1} parent=1 // pred_check
      _
    $region7: #{mamba_forward.1} parent=1 // pred_check_branch
      %18 = sbr.rel (0) target = $region9
    $region8: #{mamba_forward.1} parent=1 // pred_region
      _
    $region9: #{mamba_forward.1} parent=1 // pred_fallthru
      _
    // Predicated region
    $region10: #{mamba_forward.1} parent=1 // pred_check
      _
    $region11: #{mamba_forward.1} parent=1 // pred_check_branch
      %20 = sbr.rel (0) target = $region13
    $region12: #{mamba_forward.1} parent=1 // pred_region
      _
    $region13: #{mamba_forward.1} parent=1 // pred_fallthru
      _
    // Predicated region
    $region14: #{mamba_forward.1} parent=1 // pred_check
      _
    $region15: #{mamba_forward.1} parent=1 // pred_check_branch
      %22 = sbr.rel (0) target = $region17
    $region16: #{mamba_forward.1} parent=1 // pred_region
      _
    $region17: #{mamba_forward.1} parent=1 // pred_fallthru
      _
    // Predicated region
    $region18: #{mamba_forward.1} parent=1 // pred_check
      _
    $region19: #{mamba_forward.1} parent=1 // pred_check_branch
      %24 = sbr.rel (0) target = $region21
    $region20: #{mamba_forward.1} parent=1 // pred_region
      _
    $region21: #{mamba_forward.1} parent=1 // pred_fallthru
      _
    // Predicated region
    $region22: #{mamba_forward.1} parent=1 // pred_check
      _
    $region23: #{mamba_forward.1} parent=1 // pred_check_branch
      %26 = sbr.rel (0) target = $region25
    $region24: #{mamba_forward.1} parent=1 // pred_region
      _
    $region25: #{mamba_forward.1} parent=1 // pred_fallthru
      _
    // Predicated region
    $region26: #{mamba_forward.1} parent=1 // pred_check
      _
    $region27: #{mamba_forward.1} parent=1 // pred_check_branch
      %28 = sbr.rel (0) target = $region29
    $region28: #{mamba_forward.1} parent=1 // pred_region
      _
    $region29: #{mamba_forward.1} parent=1 // pred_fallthru
      _
    // Predicated region
    $region30: #{mamba_forward.1} parent=1 // pred_check
      _
    $region31: #{mamba_forward.1} parent=1 // pred_check_branch
      %30 = sbr.rel (0) target = $region33
    $region32: #{mamba_forward.1} parent=1 // pred_region
      _
    $region33: #{mamba_forward.1} parent=1 // pred_fallthru
      _
    // Predicated region
    $region34: #{mamba_forward.1} parent=1 // pred_check
      _
    $region35: #{mamba_forward.1} parent=1 // pred_check_branch
      %32 = sbr.rel (0) target = $region37
    $region36: #{mamba_forward.1} parent=1 // pred_region
      _
    $region37: #{mamba_forward.1} parent=1 // pred_fallthru
      _
    %v33 = vld [vmem:[%s0] sm:$0xff]
    %v34 = vld [vmem:[%s0 + $0x8] sm:$0xff]
    %v35 = vld [vmem:[%s1] sm:$0xff]
    %v36 = vld [vmem:[%s1 + $0x8] sm:$0xff]
    %v37 = vld [vmem:[%s1 + $0x10] sm:$0xff]
    %v38 = vld [vmem:[%s1 + $0x18] sm:$0xff]
    %v39 = vld [vmem:[%s1 + $0x20] sm:$0xff]
    %v40 = vld [vmem:[%s1 + $0x28] sm:$0xff]
    %v41 = vld [vmem:[%s1 + $0x30] sm:$0xff]
    %v42 = vld [vmem:[%s1 + $0x38] sm:$0xff]
    %vm43 = vcmask 261120
    %v45 = vsel %vm43, %v33, 0
    %v48 = vsel %vm43, %v34, 0
    %50 = vmatpush.msra.mxu0 0.0
    %51 = vmatpush.msra.mxu0 0.0
    %52 = vmatpush.msra.mxu0 0.0
    %53 = vmatpush.msra.mxu0 0.0
    %54 = vmatpush.msra.mxu0 0.0
    %55 = vmatpush.msra.mxu0 0.0
    %56 = vmatpush.msra.mxu0 0.0
    %57 = vmatpush.msra.mxu0 0.0
    %58 = vmatpush.msra.mxu0 0.0
    %59 = vmatpush.msra.mxu0 0.0
    %60 = vmatpush.msra.mxu0 0.0
    %61 = vmatpush.msra.mxu0 0.0
    %62 = vmatpush.msra.mxu0 %v41
    %63 = vmatpush.msra.mxu0 %v39
    %64 = vmatpush.msra.mxu0 %v37
    %65 = vmatpush.msra.mxu0 %v35
    %66 = vmatmul.f32.gmra.mxu0 %v45
    %v67 = vpop.f32.mrf.mxu0
    %v68 = vadd.f32 0.0, %v67
    %69 = vmatmul.f32.gmra.mxu0 %v48
    %v70 = vpop.f32.mrf.mxu0
    %v71 = vadd.f32 0.0, %v70
    %72 = vdwg.mxu0
    %73 = vmatpush.msra.mxu0 0.0
    %74 = vmatpush.msra.mxu0 0.0
    %75 = vmatpush.msra.mxu0 0.0
    %76 = vmatpush.msra.mxu0 0.0
    %77 = vmatpush.msra.mxu0 0.0
    %78 = vmatpush.msra.mxu0 0.0
    %79 = vmatpush.msra.mxu0 0.0
    %80 = vmatpush.msra.mxu0 0.0
    %81 = vmatpush.msra.mxu0 0.0
    %82 = vmatpush.msra.mxu0 0.0
    %83 = vmatpush.msra.mxu0 0.0
    %84 = vmatpush.msra.mxu0 0.0
    %85 = vmatpush.msra.mxu0 %v42
    %86 = vmatpush.msra.mxu0 %v40
    %87 = vmatpush.msra.mxu0 %v38
    %88 = vmatpush.msra.mxu0 %v36
    %89 = vmatmul.f32.gmra.mxu0 %v45
    %v90 = vpop.f32.mrf.mxu0
    %v91 = vadd.f32 0.0, %v90
    %92 = vmatmul.f32.gmra.mxu0 %v48
    %v93 = vpop.f32.mrf.mxu0
    %v94 = vadd.f32 0.0, %v93
    %95 = vdwg.mxu0
    %97 = vrot.lane.b32.xlu0 %v71, 64
    %v98 = vpop.permute.xlu0 %97
    %vm100 = vcmask 523264
    %v101 = vsel %vm100, %v68, %v98
    %103 = vrot.lane.b32.xlu0 %v68, 64
    %v104 = vpop.permute.xlu0 %103
    %v106 = vsel %vm100, %v104, %v71
    %108 = vrot.lane.b32.xlu0 %v94, 64
    %v109 = vpop.permute.xlu0 %108
    %v111 = vsel %vm100, %v91, %v109
    %v112 = vld [vmem:[%s2] sm:$0xff]
    %v113 = vld [vmem:[%s2 + $0x8] sm:$0xff]
    %v114 = vld [vmem:[%s2 + $0x10] sm:$0xff]
    %v115 = vld [vmem:[%s2 + $0x18] sm:$0xff]
    %v116 = vld [vmem:[%s2 + $0x20] sm:$0xff]
    %v117 = vld [vmem:[%s2 + $0x28] sm:$0xff]
    %v118 = vld [vmem:[%s2 + $0x30] sm:$0xff]
    %v119 = vld [vmem:[%s2 + $0x38] sm:$0xff]
    %v120 = vld [vmem:[%s2 + $0x40] sm:$0xff]
    %v121 = vld [vmem:[%s2 + $0x48] sm:$0xff]
    %v122 = vld [vmem:[%s2 + $0x50] sm:$0xff]
    %v123 = vld [vmem:[%s2 + $0x58] sm:$0xff]
    %v125 = vsel %vm43, %v112, 0
    %v128 = vsel %vm43, %v113, 0
    %v131 = vsel %vm43, %v114, 0
    %v134 = vsel %vm43, %v115, 0
    %v137 = vsel %vm43, %v116, 0
    %v140 = vsel %vm43, %v117, 0
    %v143 = vsel %vm43, %v118, 0
    %v146 = vsel %vm43, %v119, 0
    %v149 = vsel %vm43, %v120, 0
    %v152 = vsel %vm43, %v121, 0
    %v155 = vsel %vm43, %v122, 0
    %v158 = vsel %vm43, %v123, 0
    %160 = vmatpush.xpose.msra.mxu0 0.0
    %161 = vmatpush.xpose.msra.mxu0 0.0
    %162 = vmatpush.xpose.msra.mxu0 0.0
    %163 = vmatpush.xpose.msra.mxu0 0.0
    %164 = vmatpush.xpose.msra.mxu0 0.0
    %165 = vmatpush.xpose.msra.mxu0 0.0
    %166 = vmatpush.xpose.msra.mxu0 0.0
    %167 = vmatpush.xpose.msra.mxu0 0.0
    %168 = vmatpush.xpose.msra.mxu0 0.0
    %169 = vmatpush.xpose.msra.mxu0 0.0
    %170 = vmatpush.xpose.msra.mxu0 0.0
    %171 = vmatpush.xpose.msra.mxu0 0.0
    %172 = vmatpush.xpose.msra.mxu0 0.0
    %173 = vmatpush.xpose.msra.mxu0 0.0
    %174 = vmatpush.xpose.msra.mxu0 %v48
    %175 = vmatpush.xpose.msra.mxu0 %v45
    %176 = vmatmul.f32.gmra.mxu0 %v125
    %v177 = vpop.f32.mrf.mxu0
    %v178 = vadd.f32 0.0, %v177
    %179 = vmatmul.f32.gmra.mxu0 %v128
    %v180 = vpop.f32.mrf.mxu0
    %v181 = vadd.f32 0.0, %v180
    %182 = vmatmul.f32.gmra.mxu0 %v131
    %v183 = vpop.f32.mrf.mxu0
    %v184 = vadd.f32 0.0, %v183
    %185 = vmatmul.f32.gmra.mxu0 %v134
    %v186 = vpop.f32.mrf.mxu0
    %v187 = vadd.f32 0.0, %v186
    %188 = vmatmul.f32.gmra.mxu0 %v137
    %v189 = vpop.f32.mrf.mxu0
    %v190 = vadd.f32 0.0, %v189
    %191 = vmatmul.f32.gmra.mxu0 %v140
    %v192 = vpop.f32.mrf.mxu0
    %v193 = vadd.f32 0.0, %v192
    %194 = vmatmul.f32.gmra.mxu0 %v143
    %v195 = vpop.f32.mrf.mxu0
    %v196 = vadd.f32 0.0, %v195
    %197 = vmatmul.f32.gmra.mxu0 %v146
    %v198 = vpop.f32.mrf.mxu0
    %v199 = vadd.f32 0.0, %v198
    %200 = vmatmul.f32.gmra.mxu0 %v149
    %v201 = vpop.f32.mrf.mxu0
    %v202 = vadd.f32 0.0, %v201
    %203 = vmatmul.f32.gmra.mxu0 %v152
    %v204 = vpop.f32.mrf.mxu0
    %v205 = vadd.f32 0.0, %v204
    %206 = vmatmul.f32.gmra.mxu0 %v155
    %v207 = vpop.f32.mrf.mxu0
    %v208 = vadd.f32 0.0, %v207
    %209 = vmatmul.f32.gmra.mxu0 %v158
    %v210 = vpop.f32.mrf.mxu0
    %v211 = vadd.f32 0.0, %v210
    %212 = vdwg.mxu0
    %v213 = vld [vmem:[%s4 + $0x3] sm:$0x1]
    %v214 = vperm.slane %v213, 0
    %v215 = vmul.f32 %v214, %v106
    %v217 = vrot.slane %v106, 5
    %vm219 = vcmask 1042432
    %v220 = vsel %vm219, 0.0, %v217
    %v221 = vld [vmem:[%s4] sm:$0x1]
    %v222 = vperm.slane %v221, 0
    %v223 = vmul.f32 %v222, %v220
    %v224 = vadd.f32 %v215, %v223
    %v225 = vrot.slane %v106, 6
    %vm227 = vcmask 1041408
    %v228 = vsel %vm227, 0.0, %v225
    %v229 = vld [vmem:[%s4 + $0x1] sm:$0x1]
    %v230 = vperm.slane %v229, 0
    %v231 = vmul.f32 %v230, %v228
    %v232 = vadd.f32 %v224, %v231
    %v233 = vrot.slane %v106, 7
    %vm235 = vcmask 1040384
    %v236 = vsel %vm235, 0.0, %v233
    %v237 = vld [vmem:[%s4 + $0x2] sm:$0x1]
    %v238 = vperm.slane %v237, 0
    %v239 = vmul.f32 %v238, %v236
    %v240 = vadd.f32 %v232, %v239
    %v241 = vld [vmem:[%s5] sm:$0x1]
    %v243 = vperm.slane %v241, 0
    %v245 = vadd.f32 %v240, %v243
    %v246 = vsub.f32 0.0, %v245
    %v247 = vmul.f32 %v246, 1.442695
    %v248 = vpow.pop %v247
    %v249 = vadd.f32 %v248, 1.0
    %v250 = vrcp.pop %v249
    %v251 = vmul.f32 %v249, %v250
    %v252 = vsub.f32 1.0, %v251
    %v253 = vmul.f32 %v250, %v252
    %v254 = vadd.f32 %v250, %v253
    %vm255 = vweird.f32 %v249
    %vm256 = vweird.f32 %v250
    %vm257 = vmor %vm255, %vm256
    %v258 = vsel %vm257, %v250, %v254
    %v259 = vand.u32 2147483647, %v249
    %vm260 = vcmp.eq.f32.partialorder %v259, 8.507059e+37
    %v261 = vand.u32 %v249, 2147483648
    %v262 = vor.u32 1.1754944e-38, %v261
    %v263 = vsel %vm260, %v262, %v258
    %v264 = vmul.f32 1.0, %v263
    %v265 = vmul.f32 %v245, %v264
    %v266 = vld [vmem:[%s3] sm:$0x1]
    %v268 = vperm.slane %v266, 0
    %v270 = vadd.f32 %v111, %v268
    %vm271 = vcmp.gt.f32.partialorder %v270, 20.0
    %v272 = vmin.f32 %v270, 20.0
    %v273 = vmul.f32 %v272, 1.442695
    %v274 = vpow.pop %v273
    %v275 = vadd.f32 %v274, 1.0
    %v276 = vlog2.pop %v275
    %v277 = vmul.f32 %v276, 0.6931472
    %v278 = vsel %vm271, %v270, %v277
    %v279 = vmul.f32 %v278, %v265
    %v280 = vld [vmem:[%s6] sm:$0xff]
    %v281 = vld [vmem:[%s6 + $0x8] sm:$0xff]
    %v282 = vlaneseq
    %v283 = vand.u32 %v282, 127
    %v284 = vperm.slane %v278, 0
    %v285 = vmul.f32 %v284, %v280
    %v286 = vmul.f32 %v284, %v281
    %v287 = vmul.f32 %v285, 1.442695
    %v288 = vpow.pop %v287
    %v289 = vmul.f32 %v286, 1.442695
    %v290 = vpow.pop %v289
    %vm291 = vcmp.lt.s32.totalorder %v283, 96
    %293 = vset.pattern.permute.xlu0 8
    %294 = vperm.xlu0 %293, %v178
    %v295 = vpop.permute.xlu0 %294
    %298 = vset.pattern.permute.xlu0 8
    %299 = vperm.xlu0 %298, %v181
    %v300 = vpop.permute.xlu0 %299
    %303 = vset.pattern.permute.xlu0 8
    %304 = vperm.xlu0 %303, %v184
    %v305 = vpop.permute.xlu0 %304
    %308 = vset.pattern.permute.xlu0 8
    %309 = vperm.xlu0 %308, %v187
    %v310 = vpop.permute.xlu0 %309
    %v312 = vsel %vm291, %v295, %v305
    %v313 = vsel %vm291, %v300, %v310
    %vm314 = vcmp.lt.s32.totalorder %v283, 64
    %315 = vset.pattern.permute.xlu0 0
    %316 = vperm.xlu0 %315, %v184
    %v317 = vpop.permute.xlu0 %316
    %319 = vset.pattern.permute.xlu0 0
    %320 = vperm.xlu0 %319, %v187
    %v321 = vpop.permute.xlu0 %320
    %v323 = vsel %vm314, %v317, %v312
    %v324 = vsel %vm314, %v321, %v313
    %vm325 = vcmp.lt.s32.totalorder %v283, 32
    %326 = vset.pattern.permute.xlu0 0
    %327 = vperm.xlu0 %326, %v178
    %v328 = vpop.permute.xlu0 %327
    %330 = vset.pattern.permute.xlu0 0
    %331 = vperm.xlu0 %330, %v181
    %v332 = vpop.permute.xlu0 %331
    %v334 = vsel %vm325, %v328, %v323
    %v335 = vsel %vm325, %v332, %v324
    %vm336 = vcmp.lt.s32.totalorder %v283, 112
    %338 = vset.pattern.permute.xlu0 8
    %339 = vperm.xlu0 %338, %v202
    %v340 = vpop.permute.xlu0 %339
    %343 = vset.pattern.permute.xlu0 8
    %344 = vperm.xlu0 %343, %v205
    %v345 = vpop.permute.xlu0 %344
    %348 = vset.pattern.permute.xlu0 8
    %349 = vperm.xlu0 %348, %v208
    %v350 = vpop.permute.xlu0 %349
    %353 = vset.pattern.permute.xlu0 8
    %354 = vperm.xlu0 %353, %v211
    %v355 = vpop.permute.xlu0 %354
    %v357 = vsel %vm336, %v340, %v350
    %v358 = vsel %vm336, %v345, %v355
    %360 = vset.pattern.permute.xlu0 8
    %361 = vperm.xlu0 %360, %v196
    %v362 = vpop.permute.xlu0 %361
    %365 = vset.pattern.permute.xlu0 8
    %366 = vperm.xlu0 %365, %v199
    %v367 = vpop.permute.xlu0 %366
    %v369 = vsel %vm291, %v362, %v357
    %v370 = vsel %vm291, %v367, %v358
    %vm371 = vcmp.lt.s32.totalorder %v283, 80
    %373 = vset.pattern.permute.xlu0 8
    %374 = vperm.xlu0 %373, %v190
    %v375 = vpop.permute.xlu0 %374
    %378 = vset.pattern.permute.xlu0 8
    %379 = vperm.xlu0 %378, %v193
    %v380 = vpop.permute.xlu0 %379
    %v382 = vsel %vm371, %v375, %v369
    %v383 = vsel %vm371, %v380, %v370
    %384 = vset.pattern.permute.xlu0 0
    %385 = vperm.xlu0 %384, %v208
    %v386 = vpop.permute.xlu0 %385
    %388 = vset.pattern.permute.xlu0 0
    %389 = vperm.xlu0 %388, %v211
    %v390 = vpop.permute.xlu0 %389
    %v392 = vsel %vm314, %v386, %v382
    %v393 = vsel %vm314, %v390, %v383
    %vm394 = vcmp.lt.s32.totalorder %v283, 48
    %395 = vset.pattern.permute.xlu0 0
    %396 = vperm.xlu0 %395, %v202
    %v397 = vpop.permute.xlu0 %396
    %399 = vset.pattern.permute.xlu0 0
    %400 = vperm.xlu0 %399, %v205
    %v401 = vpop.permute.xlu0 %400
    %v403 = vsel %vm394, %v397, %v392
    %v404 = vsel %vm394, %v401, %v393
    %405 = vset.pattern.permute.xlu0 0
    %406 = vperm.xlu0 %405, %v196
    %v407 = vpop.permute.xlu0 %406
    %409 = vset.pattern.permute.xlu0 0
    %410 = vperm.xlu0 %409, %v199
    %v411 = vpop.permute.xlu0 %410
    %v413 = vsel %vm325, %v407, %v403
    %v414 = vsel %vm325, %v411, %v404
    %vm415 = vcmp.lt.s32.totalorder %v283, 16
    %416 = vset.pattern.permute.xlu0 0
    %417 = vperm.xlu0 %416, %v190
    %v418 = vpop.permute.xlu0 %417
    %420 = vset.pattern.permute.xlu0 0
    %421 = vperm.xlu0 %420, %v193
    %v422 = vpop.permute.xlu0 %421
    %v424 = vsel %vm415, %v418, %v413
    %v425 = vsel %vm415, %v422, %v414
    %v426 = vmul.f32 %v288, 0.0
    %v427 = vmul.f32 %v290, 0.0
    %v428 = vperm.slane %v279, 0
    %v429 = vmul.f32 %v428, %v334
    %v430 = vmul.f32 %v428, %v335
    %v431 = vadd.f32 %v426, %v429
    %v432 = vadd.f32 %v427, %v430
    %v433 = vmul.f32 %v431, %v424
    %v434 = vmul.f32 %v432, %v425
    %v435 = vadd.f32 %v433, %v434
    %v436 = vrot.slane %v435, 4
    %v437 = vadd.f32 %v435, %v436
    %v438 = vrot.slane %v437, 2
    %v439 = vadd.f32 %v437, %v438
    %v440 = vrot.slane %v439, 1
    %v441 = vadd.f32 %v439, %v440
    %v442 = vperm.slane %v278, 1
    %v443 = vmul.f32 %v442, %v280
    %v444 = vmul.f32 %v442, %v281
    %v445 = vmul.f32 %v443, 1.442695
    %v446 = vpow.pop %v445
    %v447 = vmul.f32 %v444, 1.442695
    %v448 = vpow.pop %v447
    %449 = vset.pattern.permute.xlu0 9
    %450 = vperm.xlu0 %449, %v178
    %v451 = vpop.permute.xlu0 %450
    %453 = vset.pattern.permute.xlu0 9
    %454 = vperm.xlu0 %453, %v181
    %v455 = vpop.permute.xlu0 %454
    %457 = vset.pattern.permute.xlu0 9
    %458 = vperm.xlu0 %457, %v184
    %v459 = vpop.permute.xlu0 %458
    %461 = vset.pattern.permute.xlu0 9
    %462 = vperm.xlu0 %461, %v187
    %v463 = vpop.permute.xlu0 %462
    %v465 = vsel %vm291, %v451, %v459
    %v466 = vsel %vm291, %v455, %v463
    %467 = vset.pattern.permute.xlu0 1
    %468 = vperm.xlu0 %467, %v184
    %v469 = vpop.permute.xlu0 %468
    %471 = vset.pattern.permute.xlu0 1
    %472 = vperm.xlu0 %471, %v187
    %v473 = vpop.permute.xlu0 %472
    %v475 = vsel %vm314, %v469, %v465
    %v476 = vsel %vm314, %v473, %v466
    %477 = vset.pattern.permute.xlu0 1
    %478 = vperm.xlu0 %477, %v178
    %v479 = vpop.permute.xlu0 %478
    %481 = vset.pattern.permute.xlu0 1
    %482 = vperm.xlu0 %481, %v181
    %v483 = vpop.permute.xlu0 %482
    %v485 = vsel %vm325, %v479, %v475
    %v486 = vsel %vm325, %v483, %v476
    %487 = vset.pattern.permute.xlu0 9
    %488 = vperm.xlu0 %487, %v202
    %v489 = vpop.permute.xlu0 %488
    %491 = vset.pattern.permute.xlu0 9
    %492 = vperm.xlu0 %491, %v205
    %v493 = vpop.permute.xlu0 %492
    %495 = vset.pattern.permute.xlu0 9
    %496 = vperm.xlu0 %495, %v208
    %v497 = vpop.permute.xlu0 %496
    %499 = vset.pattern.permute.xlu0 9
    %500 = vperm.xlu0 %499, %v211
    %v501 = vpop.permute.xlu0 %500
    %v503 = vsel %vm336, %v489, %v497
    %v504 = vsel %vm336, %v493, %v501
    %505 = vset.pattern.permute.xlu0 9
    %506 = vperm.xlu0 %505, %v196
    %v507 = vpop.permute.xlu0 %506
    %509 = vset.pattern.permute.xlu0 9
    %510 = vperm.xlu0 %509, %v199
    %v511 = vpop.permute.xlu0 %510
    %v513 = vsel %vm291, %v507, %v503
    %v514 = vsel %vm291, %v511, %v504
    %515 = vset.pattern.permute.xlu0 9
    %516 = vperm.xlu0 %515, %v190
    %v517 = vpop.permute.xlu0 %516
    %519 = vset.pattern.permute.xlu0 9
    %520 = vperm.xlu0 %519, %v193
    %v521 = vpop.permute.xlu0 %520
    %v523 = vsel %vm371, %v517, %v513
    %v524 = vsel %vm371, %v521, %v514
    %525 = vset.pattern.permute.xlu0 1
    %526 = vperm.xlu0 %525, %v208
    %v527 = vpop.permute.xlu0 %526
    %529 = vset.pattern.permute.xlu0 1
    %530 = vperm.xlu0 %529, %v211
    %v531 = vpop.permute.xlu0 %530
    %v533 = vsel %vm314, %v527, %v523
    %v534 = vsel %vm314, %v531, %v524
    %535 = vset.pattern.permute.xlu0 1
    %536 = vperm.xlu0 %535, %v202
    %v537 = vpop.permute.xlu0 %536
    %539 = vset.pattern.permute.xlu0 1
    %540 = vperm.xlu0 %539, %v205
    %v541 = vpop.permute.xlu0 %540
    %v543 = vsel %vm394, %v537, %v533
    %v544 = vsel %vm394, %v541, %v534
    %545 = vset.pattern.permute.xlu0 1
    %546 = vperm.xlu0 %545, %v196
    %v547 = vpop.permute.xlu0 %546
    %549 = vset.pattern.permute.xlu0 1
    %550 = vperm.xlu0 %549, %v199
    %v551 = vpop.permute.xlu0 %550
    %v553 = vsel %vm325, %v547, %v543
    %v554 = vsel %vm325, %v551, %v544
    %555 = vset.pattern.permute.xlu0 1
    %556 = vperm.xlu0 %555, %v190
    %v557 = vpop.permute.xlu0 %556
    %559 = vset.pattern.permute.xlu0 1
    %560 = vperm.xlu0 %559, %v193
    %v561 = vpop.permute.xlu0 %560
    %v563 = vsel %vm415, %v557, %v553
    %v564 = vsel %vm415, %v561, %v554
    %v565 = vmul.f32 %v446, %v431
    %v566 = vmul.f32 %v448, %v432
    %v567 = vperm.slane %v279, 1
    %v568 = vmul.f32 %v567, %v485
    %v569 = vmul.f32 %v567, %v486
    %v570 = vadd.f32 %v565, %v568
    %v571 = vadd.f32 %v566, %v569
    %v572 = vmul.f32 %v570, %v563
    %v573 = vmul.f32 %v571, %v564
    %v574 = vadd.f32 %v572, %v573
    %v575 = vrot.slane %v574, 4
    %v576 = vadd.f32 %v574, %v575
    %v577 = vrot.slane %v576, 2
    %v578 = vadd.f32 %v576, %v577
    %v579 = vrot.slane %v578, 1
    %v580 = vadd.f32 %v578, %v579
    %v581 = vperm.slane %v278, 2
    %v582 = vmul.f32 %v581, %v280
    %v583 = vmul.f32 %v581, %v281
    %v584 = vmul.f32 %v582, 1.442695
    %v585 = vpow.pop %v584
    %v586 = vmul.f32 %v583, 1.442695
    %v587 = vpow.pop %v586
    %588 = vset.pattern.permute.xlu0 10
    %589 = vperm.xlu0 %588, %v178
    %v590 = vpop.permute.xlu0 %589
    %592 = vset.pattern.permute.xlu0 10
    %593 = vperm.xlu0 %592, %v181
    %v594 = vpop.permute.xlu0 %593
    %596 = vset.pattern.permute.xlu0 10
    %597 = vperm.xlu0 %596, %v184
    %v598 = vpop.permute.xlu0 %597
    %600 = vset.pattern.permute.xlu0 10
    %601 = vperm.xlu0 %600, %v187
    %v602 = vpop.permute.xlu0 %601
    %v604 = vsel %vm291, %v590, %v598
    %v605 = vsel %vm291, %v594, %v602
    %606 = vset.pattern.permute.xlu0 2
    %607 = vperm.xlu0 %606, %v184
    %v608 = vpop.permute.xlu0 %607
    %610 = vset.pattern.permute.xlu0 2
    %611 = vperm.xlu0 %610, %v187
    %v612 = vpop.permute.xlu0 %611
    %v614 = vsel %vm314, %v608, %v604
    %v615 = vsel %vm314, %v612, %v605
    %616 = vset.pattern.permute.xlu0 2
    %617 = vperm.xlu0 %616, %v178
    %v618 = vpop.permute.xlu0 %617
    %620 = vset.pattern.permute.xlu0 2
    %621 = vperm.xlu0 %620, %v181
    %v622 = vpop.permute.xlu0 %621
    %v624 = vsel %vm325, %v618, %v614
    %v625 = vsel %vm325, %v622, %v615
    %626 = vset.pattern.permute.xlu0 10
    %627 = vperm.xlu0 %626, %v202
    %v628 = vpop.permute.xlu0 %627
    %630 = vset.pattern.permute.xlu0 10
    %631 = vperm.xlu0 %630, %v205
    %v632 = vpop.permute.xlu0 %631
    %634 = vset.pattern.permute.xlu0 10
    %635 = vperm.xlu0 %634, %v208
    %v636 = vpop.permute.xlu0 %635
    %638 = vset.pattern.permute.xlu0 10
    %639 = vperm.xlu0 %638, %v211
    %v640 = vpop.permute.xlu0 %639
    %v642 = vsel %vm336, %v628, %v636
    %v643 = vsel %vm336, %v632, %v640
    %644 = vset.pattern.permute.xlu0 10
    %645 = vperm.xlu0 %644, %v196
    %v646 = vpop.permute.xlu0 %645
    %648 = vset.pattern.permute.xlu0 10
    %649 = vperm.xlu0 %648, %v199
    %v650 = vpop.permute.xlu0 %649
    %v652 = vsel %vm291, %v646, %v642
    %v653 = vsel %vm291, %v650, %v643
    %654 = vset.pattern.permute.xlu0 10
    %655 = vperm.xlu0 %654, %v190
    %v656 = vpop.permute.xlu0 %655
    %658 = vset.pattern.permute.xlu0 10
    %659 = vperm.xlu0 %658, %v193
    %v660 = vpop.permute.xlu0 %659
    %v662 = vsel %vm371, %v656, %v652
    %v663 = vsel %vm371, %v660, %v653
    %664 = vset.pattern.permute.xlu0 2
    %665 = vperm.xlu0 %664, %v208
    %v666 = vpop.permute.xlu0 %665
    %668 = vset.pattern.permute.xlu0 2
    %669 = vperm.xlu0 %668, %v211
    %v670 = vpop.permute.xlu0 %669
    %v672 = vsel %vm314, %v666, %v662
    %v673 = vsel %vm314, %v670, %v663
    %674 = vset.pattern.permute.xlu0 2
    %675 = vperm.xlu0 %674, %v202
    %v676 = vpop.permute.xlu0 %675
    %678 = vset.pattern.permute.xlu0 2
    %679 = vperm.xlu0 %678, %v205
    %v680 = vpop.permute.xlu0 %679
    %v682 = vsel %vm394, %v676, %v672
    %v683 = vsel %vm394, %v680, %v673
    %684 = vset.pattern.permute.xlu0 2
    %685 = vperm.xlu0 %684, %v196
    %v686 = vpop.permute.xlu0 %685
    %688 = vset.pattern.permute.xlu0 2
    %689 = vperm.xlu0 %688, %v199
    %v690 = vpop.permute.xlu0 %689
    %v692 = vsel %vm325, %v686, %v682
    %v693 = vsel %vm325, %v690, %v683
    %694 = vset.pattern.permute.xlu0 2
    %695 = vperm.xlu0 %694, %v190
    %v696 = vpop.permute.xlu0 %695
    %698 = vset.pattern.permute.xlu0 2
    %699 = vperm.xlu0 %698, %v193
    %v700 = vpop.permute.xlu0 %699
    %v702 = vsel %vm415, %v696, %v692
    %v703 = vsel %vm415, %v700, %v693
    %v704 = vmul.f32 %v585, %v570
    %v705 = vmul.f32 %v587, %v571
    %v706 = vperm.slane %v279, 2
    %v707 = vmul.f32 %v706, %v624
    %v708 = vmul.f32 %v706, %v625
    %v709 = vadd.f32 %v704, %v707
    %v710 = vadd.f32 %v705, %v708
    %v711 = vmul.f32 %v709, %v702
    %v712 = vmul.f32 %v710, %v703
    %v713 = vadd.f32 %v711, %v712
    %v714 = vrot.slane %v713, 4
    %v715 = vadd.f32 %v713, %v714
    %v716 = vrot.slane %v715, 2
    %v717 = vadd.f32 %v715, %v716
    %v718 = vrot.slane %v717, 1
    %v719 = vadd.f32 %v717, %v718
    %v720 = vperm.slane %v278, 3
    %v721 = vmul.f32 %v720, %v280
    %v722 = vmul.f32 %v720, %v281
    %v723 = vmul.f32 %v721, 1.442695
    %v724 = vpow.pop %v723
    %v725 = vmul.f32 %v722, 1.442695
    %v726 = vpow.pop %v725
    %727 = vset.pattern.permute.xlu0 11
    %728 = vperm.xlu0 %727, %v178
    %v729 = vpop.permute.xlu0 %728
    %731 = vset.pattern.permute.xlu0 11
    %732 = vperm.xlu0 %731, %v181
    %v733 = vpop.permute.xlu0 %732
    %735 = vset.pattern.permute.xlu0 11
    %736 = vperm.xlu0 %735, %v184
    %v737 = vpop.permute.xlu0 %736
    %739 = vset.pattern.permute.xlu0 11
    %740 = vperm.xlu0 %739, %v187
    %v741 = vpop.permute.xlu0 %740
    %v743 = vsel %vm291, %v729, %v737
    %v744 = vsel %vm291, %v733, %v741
    %745 = vset.pattern.permute.xlu0 3
    %746 = vperm.xlu0 %745, %v184
    %v747 = vpop.permute.xlu0 %746
    %749 = vset.pattern.permute.xlu0 3
    %750 = vperm.xlu0 %749, %v187
    %v751 = vpop.permute.xlu0 %750
    %v753 = vsel %vm314, %v747, %v743
    %v754 = vsel %vm314, %v751, %v744
    %755 = vset.pattern.permute.xlu0 3
    %756 = vperm.xlu0 %755, %v178
    %v757 = vpop.permute.xlu0 %756
    %759 = vset.pattern.permute.xlu0 3
    %760 = vperm.xlu0 %759, %v181
    %v761 = vpop.permute.xlu0 %760
    %v763 = vsel %vm325, %v757, %v753
    %v764 = vsel %vm325, %v761, %v754
    %765 = vset.pattern.permute.xlu0 11
    %766 = vperm.xlu0 %765, %v202
    %v767 = vpop.permute.xlu0 %766
    %769 = vset.pattern.permute.xlu0 11
    %770 = vperm.xlu0 %769, %v205
    %v771 = vpop.permute.xlu0 %770
    %773 = vset.pattern.permute.xlu0 11
    %774 = vperm.xlu0 %773, %v208
    %v775 = vpop.permute.xlu0 %774
    %777 = vset.pattern.permute.xlu0 11
    %778 = vperm.xlu0 %777, %v211
    %v779 = vpop.permute.xlu0 %778
    %v781 = vsel %vm336, %v767, %v775
    %v782 = vsel %vm336, %v771, %v779
    %783 = vset.pattern.permute.xlu0 11
    %784 = vperm.xlu0 %783, %v196
    %v785 = vpop.permute.xlu0 %784
    %787 = vset.pattern.permute.xlu0 11
    %788 = vperm.xlu0 %787, %v199
    %v789 = vpop.permute.xlu0 %788
    %v791 = vsel %vm291, %v785, %v781
    %v792 = vsel %vm291, %v789, %v782
    %793 = vset.pattern.permute.xlu0 11
    %794 = vperm.xlu0 %793, %v190
    %v795 = vpop.permute.xlu0 %794
    %797 = vset.pattern.permute.xlu0 11
    %798 = vperm.xlu0 %797, %v193
    %v799 = vpop.permute.xlu0 %798
    %v801 = vsel %vm371, %v795, %v791
    %v802 = vsel %vm371, %v799, %v792
    %803 = vset.pattern.permute.xlu0 3
    %804 = vperm.xlu0 %803, %v208
    %v805 = vpop.permute.xlu0 %804
    %807 = vset.pattern.permute.xlu0 3
    %808 = vperm.xlu0 %807, %v211
    %v809 = vpop.permute.xlu0 %808
    %v811 = vsel %vm314, %v805, %v801
    %v812 = vsel %vm314, %v809, %v802
    %813 = vset.pattern.permute.xlu0 3
    %814 = vperm.xlu0 %813, %v202
    %v815 = vpop.permute.xlu0 %814
    %817 = vset.pattern.permute.xlu0 3
    %818 = vperm.xlu0 %817, %v205
    %v819 = vpop.permute.xlu0 %818
    %v821 = vsel %vm394, %v815, %v811
    %v822 = vsel %vm394, %v819, %v812
    %823 = vset.pattern.permute.xlu0 3
    %824 = vperm.xlu0 %823, %v196
    %v825 = vpop.permute.xlu0 %824
    %827 = vset.pattern.permute.xlu0 3
    %828 = vperm.xlu0 %827, %v199
    %v829 = vpop.permute.xlu0 %828
    %v831 = vsel %vm325, %v825, %v821
    %v832 = vsel %vm325, %v829, %v822
    %833 = vset.pattern.permute.xlu0 3
    %834 = vperm.xlu0 %833, %v190
    %v835 = vpop.permute.xlu0 %834
    %837 = vset.pattern.permute.xlu0 3
    %838 = vperm.xlu0 %837, %v193
    %v839 = vpop.permute.xlu0 %838
    %v841 = vsel %vm415, %v835, %v831
    %v842 = vsel %vm415, %v839, %v832
    %v843 = vmul.f32 %v724, %v709
    %v844 = vmul.f32 %v726, %v710
    %v845 = vperm.slane %v279, 3
    %v846 = vmul.f32 %v845, %v763
    %v847 = vmul.f32 %v845, %v764
    %v848 = vadd.f32 %v843, %v846
    %v849 = vadd.f32 %v844, %v847
    %v850 = vmul.f32 %v848, %v841
    %v851 = vmul.f32 %v849, %v842
    %v852 = vadd.f32 %v850, %v851
    %v853 = vrot.slane %v852, 4
    %v854 = vadd.f32 %v852, %v853
    %v855 = vrot.slane %v854, 2
    %v856 = vadd.f32 %v854, %v855
    %v857 = vrot.slane %v856, 1
    %v858 = vadd.f32 %v856, %v857
    %v859 = vperm.slane %v278, 4
    %v860 = vmul.f32 %v859, %v280
    %v861 = vmul.f32 %v859, %v281
    %v862 = vmul.f32 %v860, 1.442695
    %v863 = vpow.pop %v862
    %v864 = vmul.f32 %v861, 1.442695
    %v865 = vpow.pop %v864
    %866 = vset.pattern.permute.xlu0 12
    %867 = vperm.xlu0 %866, %v178
    %v868 = vpop.permute.xlu0 %867
    %870 = vset.pattern.permute.xlu0 12
    %871 = vperm.xlu0 %870, %v181
    %v872 = vpop.permute.xlu0 %871
    %874 = vset.pattern.permute.xlu0 12
    %875 = vperm.xlu0 %874, %v184
    %v876 = vpop.permute.xlu0 %875
    %878 = vset.pattern.permute.xlu0 12
    %879 = vperm.xlu0 %878, %v187
    %v880 = vpop.permute.xlu0 %879
    %v882 = vsel %vm291, %v868, %v876
    %v883 = vsel %vm291, %v872, %v880
    %884 = vset.pattern.permute.xlu0 4
    %885 = vperm.xlu0 %884, %v184
    %v886 = vpop.permute.xlu0 %885
    %888 = vset.pattern.permute.xlu0 4
    %889 = vperm.xlu0 %888, %v187
    %v890 = vpop.permute.xlu0 %889
    %v892 = vsel %vm314, %v886, %v882
    %v893 = vsel %vm314, %v890, %v883
    %894 = vset.pattern.permute.xlu0 4
    %895 = vperm.xlu0 %894, %v178
    %v896 = vpop.permute.xlu0 %895
    %898 = vset.pattern.permute.xlu0 4
    %899 = vperm.xlu0 %898, %v181
    %v900 = vpop.permute.xlu0 %899
    %v902 = vsel %vm325, %v896, %v892
    %v903 = vsel %vm325, %v900, %v893
    %904 = vset.pattern.permute.xlu0 12
    %905 = vperm.xlu0 %904, %v202
    %v906 = vpop.permute.xlu0 %905
    %908 = vset.pattern.permute.xlu0 12
    %909 = vperm.xlu0 %908, %v205
    %v910 = vpop.permute.xlu0 %909
    %912 = vset.pattern.permute.xlu0 12
    %913 = vperm.xlu0 %912, %v208
    %v914 = vpop.permute.xlu0 %913
    %916 = vset.pattern.permute.xlu0 12
    %917 = vperm.xlu0 %916, %v211
    %v918 = vpop.permute.xlu0 %917
    %v920 = vsel %vm336, %v906, %v914
    %v921 = vsel %vm336, %v910, %v918
    %922 = vset.pattern.permute.xlu0 12
    %923 = vperm.xlu0 %922, %v196
    %v924 = vpop.permute.xlu0 %923
    %926 = vset.pattern.permute.xlu0 12
    %927 = vperm.xlu0 %926, %v199
    %v928 = vpop.permute.xlu0 %927
    %v930 = vsel %vm291, %v924, %v920
    %v931 = vsel %vm291, %v928, %v921
    %932 = vset.pattern.permute.xlu0 12
    %933 = vperm.xlu0 %932, %v190
    %v934 = vpop.permute.xlu0 %933
    %936 = vset.pattern.permute.xlu0 12
    %937 = vperm.xlu0 %936, %v193
    %v938 = vpop.permute.xlu0 %937
    %v940 = vsel %vm371, %v934, %v930
    %v941 = vsel %vm371, %v938, %v931
    %942 = vset.pattern.permute.xlu0 4
    %943 = vperm.xlu0 %942, %v208
    %v944 = vpop.permute.xlu0 %943
    %946 = vset.pattern.permute.xlu0 4
    %947 = vperm.xlu0 %946, %v211
    %v948 = vpop.permute.xlu0 %947
    %v950 = vsel %vm314, %v944, %v940
    %v951 = vsel %vm314, %v948, %v941
    %952 = vset.pattern.permute.xlu0 4
    %953 = vperm.xlu0 %952, %v202
    %v954 = vpop.permute.xlu0 %953
    %956 = vset.pattern.permute.xlu0 4
    %957 = vperm.xlu0 %956, %v205
    %v958 = vpop.permute.xlu0 %957
    %v960 = vsel %vm394, %v954, %v950
    %v961 = vsel %vm394, %v958, %v951
    %962 = vset.pattern.permute.xlu0 4
    %963 = vperm.xlu0 %962, %v196
    %v964 = vpop.permute.xlu0 %963
    %966 = vset.pattern.permute.xlu0 4
    %967 = vperm.xlu0 %966, %v199
    %v968 = vpop.permute.xlu0 %967
    %v970 = vsel %vm325, %v964, %v960
    %v971 = vsel %vm325, %v968, %v961
    %972 = vset.pattern.permute.xlu0 4
    %973 = vperm.xlu0 %972, %v190
    %v974 = vpop.permute.xlu0 %973
    %976 = vset.pattern.permute.xlu0 4
    %977 = vperm.xlu0 %976, %v193
    %v978 = vpop.permute.xlu0 %977
    %v980 = vsel %vm415, %v974, %v970
    %v981 = vsel %vm415, %v978, %v971
    %v982 = vmul.f32 %v863, %v848
    %v983 = vmul.f32 %v865, %v849
    %v984 = vperm.slane %v279, 4
    %v985 = vmul.f32 %v984, %v902
    %v986 = vmul.f32 %v984, %v903
    %v987 = vadd.f32 %v982, %v985
    %v988 = vadd.f32 %v983, %v986
    %v989 = vmul.f32 %v987, %v980
    %v990 = vmul.f32 %v988, %v981
    %v991 = vadd.f32 %v989, %v990
    %v992 = vrot.slane %v991, 4
    %v993 = vadd.f32 %v991, %v992
    %v994 = vrot.slane %v993, 2
    %v995 = vadd.f32 %v993, %v994
    %v996 = vrot.slane %v995, 1
    %v997 = vadd.f32 %v995, %v996
    %v998 = vperm.slane %v278, 5
    %v999 = vmul.f32 %v998, %v280
    %v1000 = vmul.f32 %v998, %v281
    %v1001 = vmul.f32 %v999, 1.442695
    %v1002 = vpow.pop %v1001
    %v1003 = vmul.f32 %v1000, 1.442695
    %v1004 = vpow.pop %v1003
    %1005 = vset.pattern.permute.xlu0 13
    %1006 = vperm.xlu0 %1005, %v178
    %v1007 = vpop.permute.xlu0 %1006
    %1009 = vset.pattern.permute.xlu0 13
    %1010 = vperm.xlu0 %1009, %v181
    %v1011 = vpop.permute.xlu0 %1010
    %1013 = vset.pattern.permute.xlu0 13
    %1014 = vperm.xlu0 %1013, %v184
    %v1015 = vpop.permute.xlu0 %1014
    %1017 = vset.pattern.permute.xlu0 13
    %1018 = vperm.xlu0 %1017, %v187
    %v1019 = vpop.permute.xlu0 %1018
    %v1021 = vsel %vm291, %v1007, %v1015
    %v1022 = vsel %vm291, %v1011, %v1019
    %1023 = vset.pattern.permute.xlu0 5
    %1024 = vperm.xlu0 %1023, %v184
    %v1025 = vpop.permute.xlu0 %1024
    %1027 = vset.pattern.permute.xlu0 5
    %1028 = vperm.xlu0 %1027, %v187
    %v1029 = vpop.permute.xlu0 %1028
    %v1031 = vsel %vm314, %v1025, %v1021
    %v1032 = vsel %vm314, %v1029, %v1022
    %1033 = vset.pattern.permute.xlu0 5
    %1034 = vperm.xlu0 %1033, %v178
    %v1035 = vpop.permute.xlu0 %1034
    %1037 = vset.pattern.permute.xlu0 5
    %1038 = vperm.xlu0 %1037, %v181
    %v1039 = vpop.permute.xlu0 %1038
    %v1041 = vsel %vm325, %v1035, %v1031
    %v1042 = vsel %vm325, %v1039, %v1032
    %1043 = vset.pattern.permute.xlu0 13
    %1044 = vperm.xlu0 %1043, %v202
    %v1045 = vpop.permute.xlu0 %1044
    %1047 = vset.pattern.permute.xlu0 13
    %1048 = vperm.xlu0 %1047, %v205
    %v1049 = vpop.permute.xlu0 %1048
    %1051 = vset.pattern.permute.xlu0 13
    %1052 = vperm.xlu0 %1051, %v208
    %v1053 = vpop.permute.xlu0 %1052
    %1055 = vset.pattern.permute.xlu0 13
    %1056 = vperm.xlu0 %1055, %v211
    %v1057 = vpop.permute.xlu0 %1056
    %v1059 = vsel %vm336, %v1045, %v1053
    %v1060 = vsel %vm336, %v1049, %v1057
    %1061 = vset.pattern.permute.xlu0 13
    %1062 = vperm.xlu0 %1061, %v196
    %v1063 = vpop.permute.xlu0 %1062
    %1065 = vset.pattern.permute.xlu0 13
    %1066 = vperm.xlu0 %1065, %v199
    %v1067 = vpop.permute.xlu0 %1066
    %v1069 = vsel %vm291, %v1063, %v1059
    %v1070 = vsel %vm291, %v1067, %v1060
    %1071 = vset.pattern.permute.xlu0 13
    %1072 = vperm.xlu0 %1071, %v190
    %v1073 = vpop.permute.xlu0 %1072
    %1075 = vset.pattern.permute.xlu0 13
    %1076 = vperm.xlu0 %1075, %v193
    %v1077 = vpop.permute.xlu0 %1076
    %v1079 = vsel %vm371, %v1073, %v1069
    %v1080 = vsel %vm371, %v1077, %v1070
    %1081 = vset.pattern.permute.xlu0 5
    %1082 = vperm.xlu0 %1081, %v208
    %v1083 = vpop.permute.xlu0 %1082
    %1085 = vset.pattern.permute.xlu0 5
    %1086 = vperm.xlu0 %1085, %v211
    %v1087 = vpop.permute.xlu0 %1086
    %v1089 = vsel %vm314, %v1083, %v1079
    %v1090 = vsel %vm314, %v1087, %v1080
    %1091 = vset.pattern.permute.xlu0 5
    %1092 = vperm.xlu0 %1091, %v202
    %v1093 = vpop.permute.xlu0 %1092
    %1095 = vset.pattern.permute.xlu0 5
    %1096 = vperm.xlu0 %1095, %v205
    %v1097 = vpop.permute.xlu0 %1096
    %v1099 = vsel %vm394, %v1093, %v1089
    %v1100 = vsel %vm394, %v1097, %v1090
    %1101 = vset.pattern.permute.xlu0 5
    %1102 = vperm.xlu0 %1101, %v196
    %v1103 = vpop.permute.xlu0 %1102
    %1105 = vset.pattern.permute.xlu0 5
    %1106 = vperm.xlu0 %1105, %v199
    %v1107 = vpop.permute.xlu0 %1106
    %v1109 = vsel %vm325, %v1103, %v1099
    %v1110 = vsel %vm325, %v1107, %v1100
    %1111 = vset.pattern.permute.xlu0 5
    %1112 = vperm.xlu0 %1111, %v190
    %v1113 = vpop.permute.xlu0 %1112
    %1115 = vset.pattern.permute.xlu0 5
    %1116 = vperm.xlu0 %1115, %v193
    %v1117 = vpop.permute.xlu0 %1116
    %v1119 = vsel %vm415, %v1113, %v1109
    %v1120 = vsel %vm415, %v1117, %v1110
    %v1121 = vmul.f32 %v1002, %v987
    %v1122 = vmul.f32 %v1004, %v988
    %v1123 = vperm.slane %v279, 5
    %v1124 = vmul.f32 %v1123, %v1041
    %v1125 = vmul.f32 %v1123, %v1042
    %v1126 = vadd.f32 %v1121, %v1124
    %v1127 = vadd.f32 %v1122, %v1125
    %v1128 = vmul.f32 %v1126, %v1119
    %v1129 = vmul.f32 %v1127, %v1120
    %v1130 = vadd.f32 %v1128, %v1129
    %v1131 = vrot.slane %v1130, 4
    %v1132 = vadd.f32 %v1130, %v1131
    %v1133 = vrot.slane %v1132, 2
    %v1134 = vadd.f32 %v1132, %v1133
    %v1135 = vrot.slane %v1134, 1
    %v1136 = vadd.f32 %v1134, %v1135
    %v1137 = vperm.slane %v278, 6
    %v1138 = vmul.f32 %v1137, %v280
    %v1139 = vmul.f32 %v1137, %v281
    %v1140 = vmul.f32 %v1138, 1.442695
    %v1141 = vpow.pop %v1140
    %v1142 = vmul.f32 %v1139, 1.442695
    %v1143 = vpow.pop %v1142
    %1144 = vset.pattern.permute.xlu0 14
    %1145 = vperm.xlu0 %1144, %v178
    %v1146 = vpop.permute.xlu0 %1145
    %1148 = vset.pattern.permute.xlu0 14
    %1149 = vperm.xlu0 %1148, %v181
    %v1150 = vpop.permute.xlu0 %1149
    %1152 = vset.pattern.permute.xlu0 14
    %1153 = vperm.xlu0 %1152, %v184
    %v1154 = vpop.permute.xlu0 %1153
    %1156 = vset.pattern.permute.xlu0 14
    %1157 = vperm.xlu0 %1156, %v187
    %v1158 = vpop.permute.xlu0 %1157
    %v1160 = vsel %vm291, %v1146, %v1154
    %v1161 = vsel %vm291, %v1150, %v1158
    %1162 = vset.pattern.permute.xlu0 6
    %1163 = vperm.xlu0 %1162, %v184
    %v1164 = vpop.permute.xlu0 %1163
    %1166 = vset.pattern.permute.xlu0 6
    %1167 = vperm.xlu0 %1166, %v187
    %v1168 = vpop.permute.xlu0 %1167
    %v1170 = vsel %vm314, %v1164, %v1160
    %v1171 = vsel %vm314, %v1168, %v1161
    %1172 = vset.pattern.permute.xlu0 6
    %1173 = vperm.xlu0 %1172, %v178
    %v1174 = vpop.permute.xlu0 %1173
    %1176 = vset.pattern.permute.xlu0 6
    %1177 = vperm.xlu0 %1176, %v181
    %v1178 = vpop.permute.xlu0 %1177
    %v1180 = vsel %vm325, %v1174, %v1170
    %v1181 = vsel %vm325, %v1178, %v1171
    %1182 = vset.pattern.permute.xlu0 14
    %1183 = vperm.xlu0 %1182, %v202
    %v1184 = vpop.permute.xlu0 %1183
    %1186 = vset.pattern.permute.xlu0 14
    %1187 = vperm.xlu0 %1186, %v205
    %v1188 = vpop.permute.xlu0 %1187
    %1190 = vset.pattern.permute.xlu0 14
    %1191 = vperm.xlu0 %1190, %v208
    %v1192 = vpop.permute.xlu0 %1191
    %1194 = vset.pattern.permute.xlu0 14
    %1195 = vperm.xlu0 %1194, %v211
    %v1196 = vpop.permute.xlu0 %1195
    %v1198 = vsel %vm336, %v1184, %v1192
    %v1199 = vsel %vm336, %v1188, %v1196
    %1200 = vset.pattern.permute.xlu0 14
    %1201 = vperm.xlu0 %1200, %v196
    %v1202 = vpop.permute.xlu0 %1201
    %1204 = vset.pattern.permute.xlu0 14
    %1205 = vperm.xlu0 %1204, %v199
    %v1206 = vpop.permute.xlu0 %1205
    %v1208 = vsel %vm291, %v1202, %v1198
    %v1209 = vsel %vm291, %v1206, %v1199
    %1210 = vset.pattern.permute.xlu0 14
    %1211 = vperm.xlu0 %1210, %v190
    %v1212 = vpop.permute.xlu0 %1211
    %1214 = vset.pattern.permute.xlu0 14
    %1215 = vperm.xlu0 %1214, %v193
    %v1216 = vpop.permute.xlu0 %1215
    %v1218 = vsel %vm371, %v1212, %v1208
    %v1219 = vsel %vm371, %v1216, %v1209
    %1220 = vset.pattern.permute.xlu0 6
    %1221 = vperm.xlu0 %1220, %v208
    %v1222 = vpop.permute.xlu0 %1221
    %1224 = vset.pattern.permute.xlu0 6
    %1225 = vperm.xlu0 %1224, %v211
    %v1226 = vpop.permute.xlu0 %1225
    %v1228 = vsel %vm314, %v1222, %v1218
    %v1229 = vsel %vm314, %v1226, %v1219
    %1230 = vset.pattern.permute.xlu0 6
    %1231 = vperm.xlu0 %1230, %v202
    %v1232 = vpop.permute.xlu0 %1231
    %1234 = vset.pattern.permute.xlu0 6
    %1235 = vperm.xlu0 %1234, %v205
    %v1236 = vpop.permute.xlu0 %1235
    %v1238 = vsel %vm394, %v1232, %v1228
    %v1239 = vsel %vm394, %v1236, %v1229
    %1240 = vset.pattern.permute.xlu0 6
    %1241 = vperm.xlu0 %1240, %v196
    %v1242 = vpop.permute.xlu0 %1241
    %1244 = vset.pattern.permute.xlu0 6
    %1245 = vperm.xlu0 %1244, %v199
    %v1246 = vpop.permute.xlu0 %1245
    %v1248 = vsel %vm325, %v1242, %v1238
    %v1249 = vsel %vm325, %v1246, %v1239
    %1250 = vset.pattern.permute.xlu0 6
    %1251 = vperm.xlu0 %1250, %v190
    %v1252 = vpop.permute.xlu0 %1251
    %1254 = vset.pattern.permute.xlu0 6
    %1255 = vperm.xlu0 %1254, %v193
    %v1256 = vpop.permute.xlu0 %1255
    %v1258 = vsel %vm415, %v1252, %v1248
    %v1259 = vsel %vm415, %v1256, %v1249
    %v1260 = vmul.f32 %v1141, %v1126
    %v1261 = vmul.f32 %v1143, %v1127
    %v1262 = vperm.slane %v279, 6
    %v1263 = vmul.f32 %v1262, %v1180
    %v1264 = vmul.f32 %v1262, %v1181
    %v1265 = vadd.f32 %v1260, %v1263
    %v1266 = vadd.f32 %v1261, %v1264
    %v1267 = vmul.f32 %v1265, %v1258
    %v1268 = vmul.f32 %v1266, %v1259
    %v1269 = vadd.f32 %v1267, %v1268
    %v1270 = vrot.slane %v1269, 4
    %v1271 = vadd.f32 %v1269, %v1270
    %v1272 = vrot.slane %v1271, 2
    %v1273 = vadd.f32 %v1271, %v1272
    %v1274 = vrot.slane %v1273, 1
    %v1275 = vadd.f32 %v1273, %v1274
    %v1276 = vperm.slane %v278, 7
    %v1277 = vmul.f32 %v1276, %v280
    %v1278 = vmul.f32 %v1276, %v281
    %v1279 = vmul.f32 %v1277, 1.442695
    %v1280 = vpow.pop %v1279
    %v1281 = vmul.f32 %v1278, 1.442695
    %v1282 = vpow.pop %v1281
    %1283 = vset.pattern.permute.xlu0 15
    %1284 = vperm.xlu0 %1283, %v178
    %v1285 = vpop.permute.xlu0 %1284
    %1287 = vset.pattern.permute.xlu0 15
    %1288 = vperm.xlu0 %1287, %v181
    %v1289 = vpop.permute.xlu0 %1288
    %1291 = vset.pattern.permute.xlu0 15
    %1292 = vperm.xlu0 %1291, %v184
    %v1293 = vpop.permute.xlu0 %1292
    %1295 = vset.pattern.permute.xlu0 15
    %1296 = vperm.xlu0 %1295, %v187
    %v1297 = vpop.permute.xlu0 %1296
    %v1299 = vsel %vm291, %v1285, %v1293
    %v1300 = vsel %vm291, %v1289, %v1297
    %1301 = vset.pattern.permute.xlu0 7
    %1302 = vperm.xlu0 %1301, %v184
    %v1303 = vpop.permute.xlu0 %1302
    %1305 = vset.pattern.permute.xlu0 7
    %1306 = vperm.xlu0 %1305, %v187
    %v1307 = vpop.permute.xlu0 %1306
    %v1309 = vsel %vm314, %v1303, %v1299
    %v1310 = vsel %vm314, %v1307, %v1300
    %1311 = vset.pattern.permute.xlu0 7
    %1312 = vperm.xlu0 %1311, %v178
    %v1313 = vpop.permute.xlu0 %1312
    %1315 = vset.pattern.permute.xlu0 7
    %1316 = vperm.xlu0 %1315, %v181
    %v1317 = vpop.permute.xlu0 %1316
    %v1319 = vsel %vm325, %v1313, %v1309
    %v1320 = vsel %vm325, %v1317, %v1310
    %1321 = vset.pattern.permute.xlu0 15
    %1322 = vperm.xlu0 %1321, %v202
    %v1323 = vpop.permute.xlu0 %1322
    %1325 = vset.pattern.permute.xlu0 15
    %1326 = vperm.xlu0 %1325, %v205
    %v1327 = vpop.permute.xlu0 %1326
    %1329 = vset.pattern.permute.xlu0 15
    %1330 = vperm.xlu0 %1329, %v208
    %v1331 = vpop.permute.xlu0 %1330
    %1333 = vset.pattern.permute.xlu0 15
    %1334 = vperm.xlu0 %1333, %v211
    %v1335 = vpop.permute.xlu0 %1334
    %v1337 = vsel %vm336, %v1323, %v1331
    %v1338 = vsel %vm336, %v1327, %v1335
    %1339 = vset.pattern.permute.xlu0 15
    %1340 = vperm.xlu0 %1339, %v196
    %v1341 = vpop.permute.xlu0 %1340
    %1343 = vset.pattern.permute.xlu0 15
    %1344 = vperm.xlu0 %1343, %v199
    %v1345 = vpop.permute.xlu0 %1344
    %v1347 = vsel %vm291, %v1341, %v1337
    %v1348 = vsel %vm291, %v1345, %v1338
    %1349 = vset.pattern.permute.xlu0 15
    %1350 = vperm.xlu0 %1349, %v190
    %v1351 = vpop.permute.xlu0 %1350
    %1353 = vset.pattern.permute.xlu0 15
    %1354 = vperm.xlu0 %1353, %v193
    %v1355 = vpop.permute.xlu0 %1354
    %v1357 = vsel %vm371, %v1351, %v1347
    %v1358 = vsel %vm371, %v1355, %v1348
    %1359 = vset.pattern.permute.xlu0 7
    %1360 = vperm.xlu0 %1359, %v208
    %v1361 = vpop.permute.xlu0 %1360
    %1363 = vset.pattern.permute.xlu0 7
    %1364 = vperm.xlu0 %1363, %v211
    %v1365 = vpop.permute.xlu0 %1364
    %v1367 = vsel %vm314, %v1361, %v1357
    %v1368 = vsel %vm314, %v1365, %v1358
    %1369 = vset.pattern.permute.xlu0 7
    %1370 = vperm.xlu0 %1369, %v202
    %v1371 = vpop.permute.xlu0 %1370
    %1373 = vset.pattern.permute.xlu0 7
    %1374 = vperm.xlu0 %1373, %v205
    %v1375 = vpop.permute.xlu0 %1374
    %v1377 = vsel %vm394, %v1371, %v1367
    %v1378 = vsel %vm394, %v1375, %v1368
    %1379 = vset.pattern.permute.xlu0 7
    %1380 = vperm.xlu0 %1379, %v196
    %v1381 = vpop.permute.xlu0 %1380
    %1383 = vset.pattern.permute.xlu0 7
    %1384 = vperm.xlu0 %1383, %v199
    %v1385 = vpop.permute.xlu0 %1384
    %v1387 = vsel %vm325, %v1381, %v1377
    %v1388 = vsel %vm325, %v1385, %v1378
    %1389 = vset.pattern.permute.xlu0 7
    %1390 = vperm.xlu0 %1389, %v190
    %v1391 = vpop.permute.xlu0 %1390
    %1393 = vset.pattern.permute.xlu0 7
    %1394 = vperm.xlu0 %1393, %v193
    %v1395 = vpop.permute.xlu0 %1394
    %v1397 = vsel %vm415, %v1391, %v1387
    %v1398 = vsel %vm415, %v1395, %v1388
    %v1399 = vmul.f32 %v1280, %v1265
    %v1400 = vmul.f32 %v1282, %v1266
    %v1401 = vperm.slane %v279, 7
    %v1402 = vmul.f32 %v1401, %v1319
    %v1403 = vmul.f32 %v1401, %v1320
    %v1404 = vadd.f32 %v1399, %v1402
    %v1405 = vadd.f32 %v1400, %v1403
    %v1406 = vmul.f32 %v1404, %v1397
    %v1407 = vmul.f32 %v1405, %v1398
    %v1408 = vadd.f32 %v1406, %v1407
    %v1409 = vrot.slane %v1408, 4
    %v1410 = vadd.f32 %v1408, %v1409
    %v1411 = vrot.slane %v1410, 2
    %v1412 = vadd.f32 %v1410, %v1411
    %v1413 = vrot.slane %v1412, 1
    %v1414 = vadd.f32 %v1412, %v1413
    %v1415 = vsel %vm235, %v441, %v580
    %v1416 = vsel %vm227, %v1415, %v719
    %v1417 = vsel %vm219, %v1416, %v858
    %vm1418 = vcmask 1043456
    %v1419 = vsel %vm1418, %v1417, %v997
    %vm1420 = vcmask 1044480
    %v1421 = vsel %vm1420, %v1419, %v1136
    %vm1422 = vcmask 1045504
    %v1423 = vsel %vm1422, %v1421, %v1275
    %vm1424 = vcmask 1046528
    %v1425 = vsel %vm1424, %v1423, %v1414
    %v1426 = vld [vmem:[%s7] sm:$0x1]
    %v1428 = vperm.slane %v1426, 0
    %v1430 = vmul.f32 %v1428, %v265
    %v1431 = vadd.f32 %v1425, %v1430
    %v1432 = vsub.f32 0.0, %v101
    %v1433 = vmul.f32 %v1432, 1.442695
    %v1434 = vpow.pop %v1433
    %v1435 = vadd.f32 %v1434, 1.0
    %v1436 = vrcp.pop %v1435
    %v1437 = vmul.f32 %v1435, %v1436
    %v1438 = vsub.f32 1.0, %v1437
    %v1439 = vmul.f32 %v1436, %v1438
    %v1440 = vadd.f32 %v1436, %v1439
    %vm1441 = vweird.f32 %v1435
    %vm1442 = vweird.f32 %v1436
    %vm1443 = vmor %vm1441, %vm1442
    %v1444 = vsel %vm1443, %v1436, %v1440
    %v1445 = vand.u32 2147483647, %v1435
    %vm1446 = vcmp.eq.f32.partialorder %v1445, 8.507059e+37
    %v1447 = vand.u32 %v1435, 2147483648
    %v1448 = vor.u32 1.1754944e-38, %v1447
    %v1449 = vsel %vm1446, %v1448, %v1444
    %v1450 = vmul.f32 1.0, %v1449
    %v1451 = vmul.f32 %v101, %v1450
    %v1452 = vmul.f32 %v1431, %v1451
    %v1453 = vld [vmem:[%s8] sm:$0xff]
    %v1454 = vld [vmem:[%s8 + $0x8] sm:$0xff]
    %v1455 = vld [vmem:[%s8 + $0x10] sm:$0xff]
    %v1456 = vld [vmem:[%s8 + $0x18] sm:$0xff]
    %v1457 = vld [vmem:[%s8 + $0x20] sm:$0xff]
    %v1458 = vld [vmem:[%s8 + $0x28] sm:$0xff]
    %v1459 = vld [vmem:[%s8 + $0x30] sm:$0xff]
    %v1460 = vld [vmem:[%s8 + $0x38] sm:$0xff]
    %v1461 = vld [vmem:[%s8 + $0x40] sm:$0xff]
    %v1462 = vld [vmem:[%s8 + $0x48] sm:$0xff]
    %v1463 = vld [vmem:[%s8 + $0x50] sm:$0xff]
    %v1464 = vld [vmem:[%s8 + $0x58] sm:$0xff]
    %v1465 = vld [vmem:[%s8 + $0x60] sm:$0xff]
    %v1466 = vld [vmem:[%s8 + $0x68] sm:$0xff]
    %v1467 = vld [vmem:[%s8 + $0x70] sm:$0xff]
    %v1468 = vld [vmem:[%s8 + $0x78] sm:$0xff]
    %1469 = vmatpush.msra.mxu0 %v1468
    %1470 = vmatpush.msra.mxu0 %v1467
    %1471 = vmatpush.msra.mxu0 %v1466
    %1472 = vmatpush.msra.mxu0 %v1465
    %1473 = vmatpush.msra.mxu0 %v1464
    %1474 = vmatpush.msra.mxu0 %v1463
    %1475 = vmatpush.msra.mxu0 %v1462
    %1476 = vmatpush.msra.mxu0 %v1461
    %1477 = vmatpush.msra.mxu0 %v1460
    %1478 = vmatpush.msra.mxu0 %v1459
    %1479 = vmatpush.msra.mxu0 %v1458
    %1480 = vmatpush.msra.mxu0 %v1457
    %1481 = vmatpush.msra.mxu0 %v1456
    %1482 = vmatpush.msra.mxu0 %v1455
    %1483 = vmatpush.msra.mxu0 %v1454
    %1484 = vmatpush.msra.mxu0 %v1453
    %1485 = vmatmul.f32.gmra.mxu0 %v1452
    %v1486 = vpop.f32.mrf.mxu0
    %v1487 = vadd.f32 0.0, %v1486
    %1488 = vdwg.mxu0
    %1489 = vst.msk [vmem:[#allocation2] sm:$0xff] %vm43, %v1487
    %1491 = vrot.lane.b32.xlu0 %v1487, 96
    %v1492 = vpop.permute.xlu0 %1491
    %s1494 = scalar_lea.vmem [#allocation2], 8
    %1495 = vst.msk [vmem:[%s1494] sm:$0xff] %vm43, %v1492
    // Predicated region
    $region38: #{mamba_forward.1} parent=1 // pred_check
      _
    $region39: #{mamba_forward.1} parent=1 // pred_check_branch
      %1497 = sbr.rel (0) target = $region41
    $region40: #{mamba_forward.1} parent=1 // pred_region
      %1499 = vsyncadd [#allocation3], 0
      %s1500 = sshll.u32 [#allocation2], 4
      %s1501 = int_to_ptr.vmem [resolvable:$true] %s1500
      %s1502 = sshll.u32 %s9, 4
      %s1503 = int_to_ptr.hbm [resolvable:$true] %s1502
      %1508 = dma.vmem_to_hbm [thread:$0]  %s1501, 256, %s1503, [#allocation3], 128, 128, 8
    $region41: #{mamba_forward.1} parent=1 // pred_fallthru
      _
    // Predicated region
    $region42: #{mamba_forward.1} parent=1 // pred_check
      _
    $region43: #{mamba_forward.1} parent=1 // pred_check_branch
      %1510 = sbr.rel (0) target = $region45
    $region44: #{mamba_forward.1} parent=1 // pred_region
      %1512 = dma.done [#allocation3], 256
    $region45: #{mamba_forward.1} parent=1 // pred_fallthru
      _
    %1513 = vsyncpa [#allocation3], 1

</llo_original>
